<compile_context>
chip_gen: v6e
topology: v6e:2x2x1
jax: 0.10.0
libtpu: 0.0.40
codegen_flags: <defaults>
</compile_context>

<pallas_src>
import jax
import jax.numpy as jnp
from jax.experimental import pallas as pl
from jax.experimental.pallas import tpu as pltpu


def _generator_kernel(x_ref, w1, b1, w2, b2, w3, b3, w4, b4, o_ref):
    # x_ref: (tm, K0) f32; wN: (K, N) bf16 (VMEM-resident); bN: (1, N) f32.
    h = x_ref[...].astype(jnp.bfloat16)
    # fc1..fc3 + leaky_relu(0.2); statically unrolled (shapes differ per layer).
    for w_ref, b_ref in ((w1, b1), (w2, b2), (w3, b3)):
        acc = jnp.dot(h, w_ref[...], preferred_element_type=jnp.float32)
        acc = acc + b_ref[...]
        acc = jnp.maximum(acc, 0.2 * acc)     # leaky_relu(0.2), 2 VPU ops
        h = acc.astype(jnp.bfloat16)
    # fc4 + tanh; store bf16 (lane-dense, half the writeback of f32).
    acc = jnp.dot(h, w4[...], preferred_element_type=jnp.float32) + b4[...]
    o_ref[...] = jnp.tanh(acc).astype(o_ref.dtype)


def _round_up(x, m):
    return ((x + m - 1) // m) * m


def generator_forward(params, x, out_dtype=jnp.bfloat16):
    """Fused Generator forward.

    x: [M, g_input_dim] f32 -> [M, g_output_dim] (bf16 by default; tanh output
    is in [-1,1] so bf16 is numerically benign and halves HBM writeback).
    """
    (w1, b1), (w2, b2), (w3, b3), (w4, b4) = params
    M, K0 = x.shape
    N = w4.shape[1]

    # ---- batch tiling -------------------------------------------------------
    # M <= 128: single tile (fixed-overhead bound anyway).
    # M  > 128: guarantee grid >= 2 (both v7x TensorCores busy) and grow the
    #           tile with M to amortize ~0.35 us/step overhead on v6e/v7x.
    if M <= 128:
        tm = _round_up(M, 8)
    elif M <= 512:
        tm = 128
    elif M <= 2048:
        tm = 256
    else:
        tm = 512
    m_pad = _round_up(M, tm)
    if m_pad != M:
        x = jnp.pad(x, ((0, m_pad - M), (0, 0)))

    # ---- lane-dense output: pad ragged g_output_dim to a multiple of 128 ----
    n_pad = _round_up(N, 128)
    if n_pad != N:
        w4 = jnp.pad(w4, ((0, 0), (0, n_pad - N)))
        b4 = jnp.pad(b4, ((0, n_pad - N),))

    weights = (w1.astype(jnp.bfloat16), w2.astype(jnp.bfloat16),
               w3.astype(jnp.bfloat16), w4.astype(jnp.bfloat16))
    biases = tuple(b.reshape(1, -1).astype(jnp.float32) for b in (b1, b2, b3, b4))

    def resident(a):  # full-array block, same index every step -> VMEM-resident
        return pl.BlockSpec(a.shape, lambda i: (0, 0))

    in_specs = [pl.BlockSpec((tm, K0), lambda i: (i, 0))]
    operands = [x]
    for w, b in zip(weights, biases):
        in_specs += [resident(w), resident(b)]
        operands += [w, b]

    flops = 2 * m_pad * sum(w.shape[0] * w.shape[1] for w in weights)
    bytes_accessed = (
        x.size * x.dtype.itemsize
        + sum(w.size * w.dtype.itemsize for w in weights)
        + sum(b.size * b.dtype.itemsize for b in biases)
        + m_pad * n_pad * jnp.dtype(out_dtype).itemsize
    )

    out = pl.pallas_call(
        _generator_kernel,
        out_shape=jax.ShapeDtypeStruct((m_pad, n_pad), out_dtype),
        grid=(m_pad // tm,),
        in_specs=in_specs,
        out_specs=pl.BlockSpec((tm, n_pad), lambda i: (i, 0)),
        compiler_params=pltpu.CompilerParams(
            dimension_semantics=("parallel",),
            vmem_limit_bytes=32 * 1024 * 1024,  # safe at tm=512 on v5e/v6e/v7x
        ),
        cost_estimate=pl.CostEstimate(
            flops=flops,
            transcendentals=m_pad * n_pad,   # tanh
            bytes_accessed=bytes_accessed,
        ),
    )(*operands)
    return out[:M, :N]


def init_generator_params(key, g_input_dim, g_output_dim):
    """Deterministic init mimicking nn.Linear default (U[-1/sqrt(fan_in), +]).

    Weights stored [in, out] (so the kernel does x @ W, equivalent to
    PyTorch's x @ W.T with W=[out, in]); biases stored in f32.
    """
    dims = [g_input_dim, 256, 512, 1024, g_output_dim]
    params = []
    for i in range(4):
        fan_in, fan_out = dims[i], dims[i + 1]
        key, kw, kb = jax.random.split(key, 3)
        bound = 1.0 / (fan_in ** 0.5)
        w = jax.random.uniform(kw, (fan_in, fan_out), jnp.float32, -bound, bound)
        b = jax.random.uniform(kb, (fan_out,), jnp.float32, -bound, bound)
        params.append((w, b))
    return params


if __name__ == "__main__":
    g_input_dim = 64     # latent dim (small, analogous to z_dim=100)
    g_output_dim = 128   # output dim (small, analogous to 784)
    batch = 8

    key = jax.random.PRNGKey(0)
    key, kx = jax.random.split(key)
    x = jax.random.normal(kx, (batch, g_input_dim), jnp.float32)
    params = init_generator_params(key, g_input_dim, g_output_dim)

    out = jax.block_until_ready(generator_forward(params, x))

    # Reference 1: same bf16-weight / f32-accumulate arithmetic in plain JAX.
    def ref_forward_bf16(params, x):
        h = x.astype(jnp.bfloat16)
        for i, (w, b) in enumerate(params):
            acc = jnp.dot(h, w.astype(jnp.bfloat16),
                          preferred_element_type=jnp.float32) + b
            if i < 3:
                acc = jnp.maximum(acc, 0.2 * acc)
                h = acc.astype(jnp.bfloat16)
            else:
                return jnp.tanh(acc)

    # Reference 2: full-f32 math (the exact PyTorch forward), looser tolerance.
    def ref_forward_f32(params, x):
        h = x
        for i, (w, b) in enumerate(params):
            h = h @ w + b
            if i < 3:
                h = jnp.where(h >= 0, h, 0.2 * h)
            else:
                h = jnp.tanh(h)
        return h

    out_f32 = out.astype(jnp.float32)
    ref_bf16 = ref_forward_bf16(params, x)
    ref_f32 = ref_forward_f32(params, x)

    assert out.shape == (batch, g_output_dim)
    # bf16 output store adds up to ~4e-3 rounding on top of matmul diffs.
    assert jnp.allclose(out_f32, ref_bf16, atol=1e-2, rtol=1e-2)
    assert jnp.allclose(out_f32, ref_f32, atol=5e-2, rtol=5e-2)
    print("KERNEL_OK")
</pallas_src>

<mosaic_0001>
module attributes {stable_mosaic.version = 11 : i64} {
  func.func @_generator_kernel(%arg0: i32, %arg1: memref<8x64xf32, #tpu.memory_space<vmem>>, %arg2: memref<64x256xbf16, #tpu.memory_space<vmem>>, %arg3: memref<1x256xf32, #tpu.memory_space<vmem>>, %arg4: memref<256x512xbf16, #tpu.memory_space<vmem>>, %arg5: memref<1x512xf32, #tpu.memory_space<vmem>>, %arg6: memref<512x1024xbf16, #tpu.memory_space<vmem>>, %arg7: memref<1x1024xf32, #tpu.memory_space<vmem>>, %arg8: memref<1024x128xbf16, #tpu.memory_space<vmem>>, %arg9: memref<1x128xf32, #tpu.memory_space<vmem>>, %arg10: memref<8x128xbf16, #tpu.memory_space<vmem>>) attributes {dimension_semantics = [#tpu.dimension_semantics<parallel>], iteration_bounds = array<i64: 1>, scalar_prefetch = 0 : i64, scratch_operands = 0 : i64, tpu.core_type = #tpu.core_type<tc>, window_params = [{transform_indices = @transform_0, window_bounds = array<i64: 8, 64>}, {pipeline_mode = #tpu.pipeline_mode<synchronous>, transform_indices = @transform_1, window_bounds = array<i64: 64, 256>}, {pipeline_mode = #tpu.pipeline_mode<synchronous>, transform_indices = @transform_2, window_bounds = array<i64: 1, 256>}, {pipeline_mode = #tpu.pipeline_mode<synchronous>, transform_indices = @transform_3, window_bounds = array<i64: 256, 512>}, {pipeline_mode = #tpu.pipeline_mode<synchronous>, transform_indices = @transform_4, window_bounds = array<i64: 1, 512>}, {pipeline_mode = #tpu.pipeline_mode<synchronous>, transform_indices = @transform_5, window_bounds = array<i64: 512, 1024>}, {pipeline_mode = #tpu.pipeline_mode<synchronous>, transform_indices = @transform_6, window_bounds = array<i64: 1, 1024>}, {pipeline_mode = #tpu.pipeline_mode<synchronous>, transform_indices = @transform_7, window_bounds = array<i64: 1024, 128>}, {pipeline_mode = #tpu.pipeline_mode<synchronous>, transform_indices = @transform_8, window_bounds = array<i64: 1, 128>}, {transform_indices = @transform_9, window_bounds = array<i64: 8, 128>}]} {
    %c0 = arith.constant 0 : index
    %c0_0 = arith.constant 0 : index
    %0 = vector.load %arg1[%c0, %c0_0] : memref<8x64xf32, #tpu.memory_space<vmem>>, vector<8x64xf32>
    %1 = arith.truncf %0 : vector<8x64xf32> to vector<8x64xbf16>
    %c0_1 = arith.constant 0 : index
    %c0_2 = arith.constant 0 : index
    %2 = vector.load %arg2[%c0_1, %c0_2] : memref<64x256xbf16, #tpu.memory_space<vmem>>, vector<64x256xbf16>
    %cst = arith.constant dense<0.000000e+00> : vector<8x256xf32>
    %3 = tpu.matmul %1, %2, %cst {dimension_numbers = #tpu.dot_dimension_numbers<[1], [0], [0], [1], [0, 0, 1, 1], [], []>} : vector<8x64xbf16>, vector<64x256xbf16>, vector<8x256xf32> -> vector<8x256xf32>
    %c0_3 = arith.constant 0 : index
    %c0_4 = arith.constant 0 : index
    %4 = vector.load %arg3[%c0_3, %c0_4] : memref<1x256xf32, #tpu.memory_space<vmem>>, vector<1x256xf32>
    %5 = vector.broadcast %4 : vector<1x256xf32> to vector<8x256xf32>
    %6 = arith.addf %3, %5 : vector<8x256xf32>
    %cst_5 = arith.constant 2.000000e-01 : f32
    %7 = vector.broadcast %cst_5 : f32 to vector<8x256xf32>
    %8 = arith.mulf %7, %6 : vector<8x256xf32>
    %9 = arith.maximumf %6, %8 : vector<8x256xf32>
    %10 = arith.truncf %9 : vector<8x256xf32> to vector<8x256xbf16>
    %c0_6 = arith.constant 0 : index
    %c0_7 = arith.constant 0 : index
    %11 = vector.load %arg4[%c0_6, %c0_7] : memref<256x512xbf16, #tpu.memory_space<vmem>>, vector<256x512xbf16>
    %cst_8 = arith.constant dense<0.000000e+00> : vector<8x512xf32>
    %12 = tpu.matmul %10, %11, %cst_8 {dimension_numbers = #tpu.dot_dimension_numbers<[1], [0], [0], [1], [0, 0, 1, 1], [], []>} : vector<8x256xbf16>, vector<256x512xbf16>, vector<8x512xf32> -> vector<8x512xf32>
    %c0_9 = arith.constant 0 : index
    %c0_10 = arith.constant 0 : index
    %13 = vector.load %arg5[%c0_9, %c0_10] : memref<1x512xf32, #tpu.memory_space<vmem>>, vector<1x512xf32>
    %14 = vector.broadcast %13 : vector<1x512xf32> to vector<8x512xf32>
    %15 = arith.addf %12, %14 : vector<8x512xf32>
    %cst_11 = arith.constant 2.000000e-01 : f32
    %16 = vector.broadcast %cst_11 : f32 to vector<8x512xf32>
    %17 = arith.mulf %16, %15 : vector<8x512xf32>
    %18 = arith.maximumf %15, %17 : vector<8x512xf32>
    %19 = arith.truncf %18 : vector<8x512xf32> to vector<8x512xbf16>
    %c0_12 = arith.constant 0 : index
    %c0_13 = arith.constant 0 : index
    %20 = vector.load %arg6[%c0_12, %c0_13] : memref<512x1024xbf16, #tpu.memory_space<vmem>>, vector<512x1024xbf16>
    %cst_14 = arith.constant dense<0.000000e+00> : vector<8x1024xf32>
    %21 = tpu.matmul %19, %20, %cst_14 {dimension_numbers = #tpu.dot_dimension_numbers<[1], [0], [0], [1], [0, 0, 1, 1], [], []>} : vector<8x512xbf16>, vector<512x1024xbf16>, vector<8x1024xf32> -> vector<8x1024xf32>
    %c0_15 = arith.constant 0 : index
    %c0_16 = arith.constant 0 : index
    %22 = vector.load %arg7[%c0_15, %c0_16] : memref<1x1024xf32, #tpu.memory_space<vmem>>, vector<1x1024xf32>
    %23 = vector.broadcast %22 : vector<1x1024xf32> to vector<8x1024xf32>
    %24 = arith.addf %21, %23 : vector<8x1024xf32>
    %cst_17 = arith.constant 2.000000e-01 : f32
    %25 = vector.broadcast %cst_17 : f32 to vector<8x1024xf32>
    %26 = arith.mulf %25, %24 : vector<8x1024xf32>
    %27 = arith.maximumf %24, %26 : vector<8x1024xf32>
    %28 = arith.truncf %27 : vector<8x1024xf32> to vector<8x1024xbf16>
    %c0_18 = arith.constant 0 : index
    %c0_19 = arith.constant 0 : index
    %29 = vector.load %arg8[%c0_18, %c0_19] : memref<1024x128xbf16, #tpu.memory_space<vmem>>, vector<1024x128xbf16>
    %cst_20 = arith.constant dense<0.000000e+00> : vector<8x128xf32>
    %30 = tpu.matmul %28, %29, %cst_20 {dimension_numbers = #tpu.dot_dimension_numbers<[1], [0], [0], [1], [0, 0, 1, 1], [], []>} : vector<8x1024xbf16>, vector<1024x128xbf16>, vector<8x128xf32> -> vector<8x128xf32>
    %c0_21 = arith.constant 0 : index
    %c0_22 = arith.constant 0 : index
    %31 = vector.load %arg9[%c0_21, %c0_22] : memref<1x128xf32, #tpu.memory_space<vmem>>, vector<1x128xf32>
    %32 = vector.broadcast %31 : vector<1x128xf32> to vector<8x128xf32>
    %33 = arith.addf %30, %32 : vector<8x128xf32>
    %34 = math.tanh %33 : vector<8x128xf32>
    %35 = arith.truncf %34 : vector<8x128xf32> to vector<8x128xbf16>
    %c0_23 = arith.constant 0 : index
    %c0_24 = arith.constant 0 : index
    %36 = vector.load %arg10[%c0_23, %c0_24] : memref<8x128xbf16, #tpu.memory_space<vmem>>, vector<8x128xbf16>
    tpu.vector_store %arg10[%c0_23, %c0_24], %35 {strides = array<i32>} : memref<8x128xbf16, #tpu.memory_space<vmem>>, vector<8x128xbf16>,
    return
  }
  func.func @transform_0(%arg0: i32) -> (i32, i32) {
    %c0_i32 = arith.constant 0 : i32
    %c0_i32_0 = arith.constant 0 : i32
    return %arg0, %c0_i32 : i32, i32
  }
  func.func @transform_1(%arg0: i32) -> (i32, i32) {
    %c0_i32 = arith.constant 0 : i32
    %c0_i32_0 = arith.constant 0 : i32
    %c0_i32_1 = arith.constant 0 : i32
    return %c0_i32, %c0_i32_0 : i32, i32
  }
  func.func @transform_2(%arg0: i32) -> (i32, i32) {
    %c0_i32 = arith.constant 0 : i32
    %c0_i32_0 = arith.constant 0 : i32
    %c0_i32_1 = arith.constant 0 : i32
    return %c0_i32, %c0_i32_0 : i32, i32
  }
  func.func @transform_3(%arg0: i32) -> (i32, i32) {
    %c0_i32 = arith.constant 0 : i32
    %c0_i32_0 = arith.constant 0 : i32
    %c0_i32_1 = arith.constant 0 : i32
    return %c0_i32, %c0_i32_0 : i32, i32
  }
  func.func @transform_4(%arg0: i32) -> (i32, i32) {
    %c0_i32 = arith.constant 0 : i32
    %c0_i32_0 = arith.constant 0 : i32
    %c0_i32_1 = arith.constant 0 : i32
    return %c0_i32, %c0_i32_0 : i32, i32
  }
  func.func @transform_5(%arg0: i32) -> (i32, i32) {
    %c0_i32 = arith.constant 0 : i32
    %c0_i32_0 = arith.constant 0 : i32
    %c0_i32_1 = arith.constant 0 : i32
    return %c0_i32, %c0_i32_0 : i32, i32
  }
  func.func @transform_6(%arg0: i32) -> (i32, i32) {
    %c0_i32 = arith.constant 0 : i32
    %c0_i32_0 = arith.constant 0 : i32
    %c0_i32_1 = arith.constant 0 : i32
    return %c0_i32, %c0_i32_0 : i32, i32
  }
  func.func @transform_7(%arg0: i32) -> (i32, i32) {
    %c0_i32 = arith.constant 0 : i32
    %c0_i32_0 = arith.constant 0 : i32
    %c0_i32_1 = arith.constant 0 : i32
    return %c0_i32, %c0_i32_0 : i32, i32
  }
  func.func @transform_8(%arg0: i32) -> (i32, i32) {
    %c0_i32 = arith.constant 0 : i32
    %c0_i32_0 = arith.constant 0 : i32
    %c0_i32_1 = arith.constant 0 : i32
    return %c0_i32, %c0_i32_0 : i32, i32
  }
  func.func @transform_9(%arg0: i32) -> (i32, i32) {
    %c0_i32 = arith.constant 0 : i32
    %c0_i32_0 = arith.constant 0 : i32
    return %arg0, %c0_i32 : i32, i32
  }
}

</mosaic_0001>

<llo_original>
// kernel: tpu_custom_call.1
$region0: #{tpu_custom_call.1}
  #allocation0 [shape = 'u32[]', space=smem, size = 0x4, offset = 0x4, fixed_abs, tag = 'smem constant byte address 0x4 - core index']
  #allocation1 [shape = 'u32[144,128]{1,0:T(1,128)}', space=vmem, size = 0x12000, scoped, tag = 'internal scratch']
  %s0 = inlined_call_operand.hbm [shape: f32[8,64], index: 0, kind: input, shape index: {}]
  %s1 = inlined_call_operand.hbm [shape: bf16[64,256], index: 1, kind: input, shape index: {}]
  %s2 = inlined_call_operand.vmem [shape: f32[1,256], index: 2, kind: input, shape index: {}]
  %s3 = inlined_call_operand.hbm [shape: bf16[256,512], index: 3, kind: input, shape index: {}]
  %s4 = inlined_call_operand.hbm [shape: f32[1,512], index: 4, kind: input, shape index: {}]
  %s5 = inlined_call_operand.hbm [shape: bf16[512,1024], index: 5, kind: input, shape index: {}]
  %s6 = inlined_call_operand.vmem [shape: f32[1,1024], index: 6, kind: input, shape index: {}]
  %s7 = inlined_call_operand.hbm [shape: bf16[1024,128], index: 7, kind: input, shape index: {}]
  %s8 = inlined_call_operand.vmem [shape: f32[1,128], index: 8, kind: input, shape index: {}]
  %s9 = inlined_call_operand.hbm [shape: bf16[8,128], index: 9, kind: output, shape index: {}]
  %s10 = sld [smem:[#allocation0]]
  $region70: #{tpu_custom_call.1} parent=0
    _
  %s12 = ssub.s32 1, %s10
  %s13 = scalar_select 0, %s12, %s10
  $region1: #{tpu_custom_call.1} parent=0
    #allocation2 [shape = 'u8[4096]{0}', space=vmem, size = 0x1000, scoped, tag = 'input window, operand 0, single buffered']
    #allocation3 [shape = 's32[1]{0}', space=sflag, size = 0x4, scoped, tag = 'scoped memory for tpu_custom_call.1']
    #allocation4 [shape = 's32[1]{0}', space=sflag, size = 0x4, scoped, tag = 'scoped memory for tpu_custom_call.1']
    #allocation5 [shape = 'u8[32768]{0}', space=vmem, size = 0x8000, scoped, tag = 'input window, operand 1, single buffered']
    #allocation6 [shape = 's32[1]{0}', space=sflag, size = 0x4, scoped, tag = 'scoped memory for tpu_custom_call.1']
    #allocation7 [shape = 'u8[262144]{0}', space=vmem, size = 0x40000, scoped, tag = 'input window, operand 3, single buffered']
    #allocation8 [shape = 'u8[2048]{0}', space=vmem, size = 0x800, scoped, tag = 'input window, operand 4, single buffered']
    #allocation9 [shape = 's32[1]{0}', space=sflag, size = 0x4, scoped, tag = 'scoped memory for tpu_custom_call.1']
    #allocation10 [shape = 'u8[1048576]{0}', space=vmem, size = 0x100000, scoped, tag = 'input window, operand 5, single buffered']
    #allocation11 [shape = 'u8[262144]{0}', space=vmem, size = 0x40000, scoped, tag = 'input window, operand 7, single buffered']
    #allocation12 [shape = 's32[1]{0}', space=sflag, size = 0x4, scoped, tag = 'scoped memory for tpu_custom_call.1']
    #allocation13 [shape = 'u8[2048]{0}', space=vmem, size = 0x800, scoped, tag = 'output window, operand 0, single buffered']
    %14 = vsyncpa [#allocation3], 0
    %15 = vsyncpa [#allocation6], 0
    %16 = vsyncpa [#allocation9], 0
    %17 = vsyncpa [#allocation12], 0
    %18 = vsyncpa [#allocation4], 0
    // Predicated region
    $region2: #{tpu_custom_call.1} parent=1 // pred_check
      _
    $region3: #{tpu_custom_call.1} parent=1 // pred_check_branch
      %20 = sbr.rel (0) target = $region5
    $region4: #{tpu_custom_call.1} parent=1 // pred_region
      %s22 = ssub.s32 128, 128
      %23 = vsyncadd [#allocation3], %s22
      %s25 = sshll.u32 [#allocation2], 4
      %s26 = int_to_ptr.vmem [resolvable:$true] %s25
      %28 = dma.hbm_to_vmem [thread:$0]  %s0, 128, %s26, [#allocation3]
    $region5: #{tpu_custom_call.1} parent=1 // pred_fallthru
      _
    // Predicated region
    $region6: #{tpu_custom_call.1} parent=1 // pred_check
      _
    $region7: #{tpu_custom_call.1} parent=1 // pred_check_branch
      %30 = sbr.rel (0) target = $region9
    $region8: #{tpu_custom_call.1} parent=1 // pred_region
      %s32 = ssub.s32 1024, 1024
      %33 = vsyncadd [#allocation6], %s32
      %s34 = sshll.u32 [#allocation5], 4
      %s35 = int_to_ptr.vmem [resolvable:$true] %s34
      %40 = dma.hbm_to_vmem [thread:$0]  %s1, 1024, %s35, [#allocation6], 128, 128, 8
    $region9: #{tpu_custom_call.1} parent=1 // pred_fallthru
      _
    // Predicated region
    $region10: #{tpu_custom_call.1} parent=1 // pred_check
      _
    $region11: #{tpu_custom_call.1} parent=1 // pred_check_branch
      %42 = sbr.rel (0) target = $region13
    $region12: #{tpu_custom_call.1} parent=1 // pred_region
      _
    $region13: #{tpu_custom_call.1} parent=1 // pred_fallthru
      _
    // Predicated region
    $region14: #{tpu_custom_call.1} parent=1 // pred_check
      _
    $region15: #{tpu_custom_call.1} parent=1 // pred_check_branch
      %44 = sbr.rel (0) target = $region17
    $region16: #{tpu_custom_call.1} parent=1 // pred_region
      %s46 = ssub.s32 8192, 8192
      %47 = vsyncadd [#allocation6], %s46
      %s48 = sshll.u32 [#allocation7], 4
      %s49 = int_to_ptr.vmem [resolvable:$true] %s48
      %54 = dma.hbm_to_vmem [thread:$0]  %s3, 8192, %s49, [#allocation6], 256, 256, 16
    $region17: #{tpu_custom_call.1} parent=1 // pred_fallthru
      _
    // Predicated region
    $region18: #{tpu_custom_call.1} parent=1 // pred_check
      _
    $region19: #{tpu_custom_call.1} parent=1 // pred_check_branch
      %56 = sbr.rel (0) target = $region21
    $region20: #{tpu_custom_call.1} parent=1 // pred_region
      %s58 = ssub.s32 64, 64
      %59 = vsyncadd [#allocation9], %s58
      %s61 = sshll.u32 [#allocation8], 4
      %s62 = int_to_ptr.vmem [resolvable:$true] %s61
      %64 = dma.hbm_to_vmem [thread:$0]  %s4, 64, %s62, [#allocation9]
    $region21: #{tpu_custom_call.1} parent=1 // pred_fallthru
      _
    // Predicated region
    $region22: #{tpu_custom_call.1} parent=1 // pred_check
      _
    $region23: #{tpu_custom_call.1} parent=1 // pred_check_branch
      %66 = sbr.rel (0) target = $region25
    $region24: #{tpu_custom_call.1} parent=1 // pred_region
      %s68 = ssub.s32 32768, 32768
      %69 = vsyncadd [#allocation9], %s68
      %s70 = sshll.u32 [#allocation10], 4
      %s71 = int_to_ptr.vmem [resolvable:$true] %s70
      %76 = dma.hbm_to_vmem [thread:$0]  %s5, 32768, %s71, [#allocation9], 512, 512, 32
    $region25: #{tpu_custom_call.1} parent=1 // pred_fallthru
      _
    // Predicated region
    $region26: #{tpu_custom_call.1} parent=1 // pred_check
      _
    $region27: #{tpu_custom_call.1} parent=1 // pred_check_branch
      %78 = sbr.rel (0) target = $region29
    $region28: #{tpu_custom_call.1} parent=1 // pred_region
      _
    $region29: #{tpu_custom_call.1} parent=1 // pred_fallthru
      _
    // Predicated region
    $region30: #{tpu_custom_call.1} parent=1 // pred_check
      _
    $region31: #{tpu_custom_call.1} parent=1 // pred_check_branch
      %80 = sbr.rel (0) target = $region33
    $region32: #{tpu_custom_call.1} parent=1 // pred_region
      %s82 = ssub.s32 8192, 8192
      %83 = vsyncadd [#allocation12], %s82
      %s84 = sshll.u32 [#allocation11], 4
      %s85 = int_to_ptr.vmem [resolvable:$true] %s84
      %90 = dma.hbm_to_vmem [thread:$0]  %s7, 8192, %s85, [#allocation12], 64, 64, 4
    $region33: #{tpu_custom_call.1} parent=1 // pred_fallthru
      _
    // Predicated region
    $region34: #{tpu_custom_call.1} parent=1 // pred_check
      _
    $region35: #{tpu_custom_call.1} parent=1 // pred_check_branch
      %92 = sbr.rel (0) target = $region37
    $region36: #{tpu_custom_call.1} parent=1 // pred_region
      _
    $region37: #{tpu_custom_call.1} parent=1 // pred_fallthru
      _
    // Predicated region
    $region38: #{tpu_custom_call.1} parent=1 // pred_check
      _
    $region39: #{tpu_custom_call.1} parent=1 // pred_check_branch
      %94 = sbr.rel (0) target = $region41
    $region40: #{tpu_custom_call.1} parent=1 // pred_region
      %95 = dma.done [#allocation3], 128
    $region41: #{tpu_custom_call.1} parent=1 // pred_fallthru
      _
    // Predicated region
    $region42: #{tpu_custom_call.1} parent=1 // pred_check
      _
    $region43: #{tpu_custom_call.1} parent=1 // pred_check_branch
      %97 = sbr.rel (0) target = $region45
    $region44: #{tpu_custom_call.1} parent=1 // pred_region
      %98 = dma.done [#allocation6], 1024
    $region45: #{tpu_custom_call.1} parent=1 // pred_fallthru
      _
    // Predicated region
    $region46: #{tpu_custom_call.1} parent=1 // pred_check
      _
    $region47: #{tpu_custom_call.1} parent=1 // pred_check_branch
      %100 = sbr.rel (0) target = $region49
    $region48: #{tpu_custom_call.1} parent=1 // pred_region
      %101 = dma.done [#allocation6], 8192
    $region49: #{tpu_custom_call.1} parent=1 // pred_fallthru
      _
    // Predicated region
    $region50: #{tpu_custom_call.1} parent=1 // pred_check
      _
    $region51: #{tpu_custom_call.1} parent=1 // pred_check_branch
      %103 = sbr.rel (0) target = $region53
    $region52: #{tpu_custom_call.1} parent=1 // pred_region
      %104 = dma.done [#allocation9], 64
    $region53: #{tpu_custom_call.1} parent=1 // pred_fallthru
      _
    // Predicated region
    $region54: #{tpu_custom_call.1} parent=1 // pred_check
      _
    $region55: #{tpu_custom_call.1} parent=1 // pred_check_branch
      %106 = sbr.rel (0) target = $region57
    $region56: #{tpu_custom_call.1} parent=1 // pred_region
      %107 = dma.done [#allocation9], 32768
    $region57: #{tpu_custom_call.1} parent=1 // pred_fallthru
      _
    // Predicated region
    $region58: #{tpu_custom_call.1} parent=1 // pred_check
      _
    $region59: #{tpu_custom_call.1} parent=1 // pred_check_branch
      %109 = sbr.rel (0) target = $region61
    $region60: #{tpu_custom_call.1} parent=1 // pred_region
      %110 = dma.done [#allocation12], 8192
    $region61: #{tpu_custom_call.1} parent=1 // pred_fallthru
      _
    %v112 = vld [vmem:[#allocation2] sm:$0xff]
    %v113 = vpack.c.bf16 %v112, %v112
    %v114 = vld [vmem:[#allocation5] sm:$0xff]
    %v115 = vld [vmem:[#allocation5 + $0x8] sm:$0xff]
    %v116 = vld [vmem:[#allocation5 + $0x10] sm:$0xff]
    %v117 = vld [vmem:[#allocation5 + $0x18] sm:$0xff]
    %v118 = vld [vmem:[#allocation5 + $0x20] sm:$0xff]
    %v119 = vld [vmem:[#allocation5 + $0x28] sm:$0xff]
    %v120 = vld [vmem:[#allocation5 + $0x30] sm:$0xff]
    %v121 = vld [vmem:[#allocation5 + $0x38] sm:$0xff]
    %v122 = vld [vmem:[%s2] sm:$0x3]
    %v124 = vlaneseq
    %v125 = vshrl.u32 %v124, 7
    %v126 = vsub.s32 0, %v125
    %v127 = vrot.slane %v122, %v126
    %v128 = vlaneseq
    %v129 = vshrl.u32 %v128, 7
    %v130 = vsub.s32 1, %v129
    %v131 = vrot.slane %v122, %v130
    %v142 = vunpack.c.l.b16 %v114
    %v143 = vunpack.c.h.b16 %v114
    %v144 = vunpack.c.l.b16 %v115
    %v145 = vunpack.c.h.b16 %v115
    %v146 = vunpack.c.l.b16 %v116
    %v147 = vunpack.c.h.b16 %v116
    %v148 = vunpack.c.l.b16 %v117
    %v149 = vunpack.c.h.b16 %v117
    %v150 = vunpack.c.l.b16 %v118
    %v151 = vunpack.c.h.b16 %v118
    %v152 = vunpack.c.l.b16 %v119
    %v153 = vunpack.c.h.b16 %v119
    %v154 = vunpack.c.l.b16 %v120
    %v155 = vunpack.c.h.b16 %v120
    %v156 = vunpack.c.l.b16 %v121
    %v157 = vunpack.c.h.b16 %v121
    %v158 = vpack.c.b16 %v144, %v142
    %v159 = vpack.c.b16 %v145, %v143
    %v160 = vpack.c.b16 %v148, %v146
    %v161 = vpack.c.b16 %v149, %v147
    %v162 = vpack.c.b16 %v152, %v150
    %v163 = vpack.c.b16 %v153, %v151
    %v164 = vpack.c.b16 %v156, %v154
    %v165 = vpack.c.b16 %v157, %v155
    %vm174 = vcmask 523264
    %v176 = vsel %vm174, %v113, 0
    %178 = vmatprep.subr.bf16.mxu0 0
    %179 = vmatpush1.bf16.msra.mxu0 0
    %180 = vmatprep.subr.bf16.mxu0 0
    %181 = vmatpush1.bf16.msra.mxu0 0
    %182 = vmatprep.subr.bf16.mxu0 0
    %183 = vmatpush1.bf16.msra.mxu0 0
    %184 = vmatprep.subr.bf16.mxu0 0
    %185 = vmatpush1.bf16.msra.mxu0 0
    %186 = vmatprep.subr.bf16.mxu0 %v165
    %187 = vmatpush1.bf16.msra.mxu0 %v164
    %188 = vmatprep.subr.bf16.mxu0 %v163
    %189 = vmatpush1.bf16.msra.mxu0 %v162
    %190 = vmatprep.subr.bf16.mxu0 %v161
    %191 = vmatpush1.bf16.msra.mxu0 %v160
    %192 = vmatprep.subr.bf16.mxu0 %v159
    %193 = vmatpush1.bf16.msra.mxu0 %v158
    %194 = vmatprep.subr.bf16.mxu0 0
    %195 = vmatpush2.bf16.msra.mxu0 0
    %196 = vmatprep.subr.bf16.mxu0 0
    %197 = vmatpush2.bf16.msra.mxu0 0
    %198 = vmatprep.subr.bf16.mxu0 0
    %199 = vmatpush2.bf16.msra.mxu0 0
    %200 = vmatprep.subr.bf16.mxu0 0
    %201 = vmatpush2.bf16.msra.mxu0 0
    %202 = vmatprep.subr.bf16.mxu0 0
    %203 = vmatpush2.bf16.msra.mxu0 0
    %204 = vmatprep.subr.bf16.mxu0 0
    %205 = vmatpush2.bf16.msra.mxu0 0
    %206 = vmatprep.subr.bf16.mxu0 0
    %207 = vmatpush2.bf16.msra.mxu0 0
    %208 = vmatprep.subr.bf16.mxu0 0
    %209 = vmatpush2.bf16.msra.mxu0 0
    %210 = vmatprep.mubr.bf16.mxu0 0
    %211 = vmatmul.mubr.bf16.gmra.mxu0 %v176
    %v212 = vpop.f32.mrf.mxu0
    %v213 = vadd.f32 %v127, %v212
    %v214 = vpop.f32.mrf.mxu0
    %v215 = vadd.f32 %v131, %v214
    %v216 = vpop.f32.mrf.mxu0
    %v217 = vpop.f32.mrf.mxu0
    %218 = vdwg.mxu0
    %v219 = vmul.f32 %v213, 0.2
    %v220 = vmul.f32 %v215, 0.2
    %v221 = vmax.f32 %v213, %v219
    %v222 = vmax.f32 %v215, %v220
    %v223 = vpack.c.bf16 %v221, %v221
    %v224 = vpack.c.bf16 %v222, %v222
    %v225 = vld [vmem:[#allocation7] sm:$0xff]
    %v226 = vld [vmem:[#allocation7 + $0x8] sm:$0xff]
    %v227 = vld [vmem:[#allocation7 + $0x10] sm:$0xff]
    %v228 = vld [vmem:[#allocation7 + $0x18] sm:$0xff]
    %v229 = vld [vmem:[#allocation7 + $0x20] sm:$0xff]
    %v230 = vld [vmem:[#allocation7 + $0x28] sm:$0xff]
    %v231 = vld [vmem:[#allocation7 + $0x30] sm:$0xff]
    %v232 = vld [vmem:[#allocation7 + $0x38] sm:$0xff]
    %v233 = vld [vmem:[#allocation7 + $0x40] sm:$0xff]
    %v234 = vld [vmem:[#allocation7 + $0x48] sm:$0xff]
    %v235 = vld [vmem:[#allocation7 + $0x50] sm:$0xff]
    %v236 = vld [vmem:[#allocation7 + $0x58] sm:$0xff]
    %v237 = vld [vmem:[#allocation7 + $0x60] sm:$0xff]
    %v238 = vld [vmem:[#allocation7 + $0x68] sm:$0xff]
    %v239 = vld [vmem:[#allocation7 + $0x70] sm:$0xff]
    %v240 = vld [vmem:[#allocation7 + $0x78] sm:$0xff]
    %v241 = vld [vmem:[#allocation7 + $0x80] sm:$0xff]
    %v242 = vld [vmem:[#allocation7 + $0x88] sm:$0xff]
    %v243 = vld [vmem:[#allocation7 + $0x90] sm:$0xff]
    %v244 = vld [vmem:[#allocation7 + $0x98] sm:$0xff]
    %v245 = vld [vmem:[#allocation7 + $0xa0] sm:$0xff]
    %v246 = vld [vmem:[#allocation7 + $0xa8] sm:$0xff]
    %v247 = vld [vmem:[#allocation7 + $0xb0] sm:$0xff]
    %v248 = vld [vmem:[#allocation7 + $0xb8] sm:$0xff]
    %v249 = vld [vmem:[#allocation7 + $0xc0] sm:$0xff]
    %v250 = vld [vmem:[#allocation7 + $0xc8] sm:$0xff]
    %v251 = vld [vmem:[#allocation7 + $0xd0] sm:$0xff]
    %v252 = vld [vmem:[#allocation7 + $0xd8] sm:$0xff]
    %v253 = vld [vmem:[#allocation7 + $0xe0] sm:$0xff]
    %v254 = vld [vmem:[#allocation7 + $0xe8] sm:$0xff]
    %v255 = vld [vmem:[#allocation7 + $0xf0] sm:$0xff]
    %v256 = vld [vmem:[#allocation7 + $0xf8] sm:$0xff]
    %v257 = vld [vmem:[#allocation7 + $0x100] sm:$0xff]
    %v258 = vld [vmem:[#allocation7 + $0x108] sm:$0xff]
    %v259 = vld [vmem:[#allocation7 + $0x110] sm:$0xff]
    %v260 = vld [vmem:[#allocation7 + $0x118] sm:$0xff]
    %v261 = vld [vmem:[#allocation7 + $0x120] sm:$0xff]
    %v262 = vld [vmem:[#allocation7 + $0x128] sm:$0xff]
    %v263 = vld [vmem:[#allocation7 + $0x130] sm:$0xff]
    %v264 = vld [vmem:[#allocation7 + $0x138] sm:$0xff]
    %v265 = vld [vmem:[#allocation7 + $0x140] sm:$0xff]
    %v266 = vld [vmem:[#allocation7 + $0x148] sm:$0xff]
    %v267 = vld [vmem:[#allocation7 + $0x150] sm:$0xff]
    %v268 = vld [vmem:[#allocation7 + $0x158] sm:$0xff]
    %v269 = vld [vmem:[#allocation7 + $0x160] sm:$0xff]
    %v270 = vld [vmem:[#allocation7 + $0x168] sm:$0xff]
    %v271 = vld [vmem:[#allocation7 + $0x170] sm:$0xff]
    %v272 = vld [vmem:[#allocation7 + $0x178] sm:$0xff]
    %v273 = vld [vmem:[#allocation7 + $0x180] sm:$0xff]
    %v274 = vld [vmem:[#allocation7 + $0x188] sm:$0xff]
    %v275 = vld [vmem:[#allocation7 + $0x190] sm:$0xff]
    %v276 = vld [vmem:[#allocation7 + $0x198] sm:$0xff]
    %v277 = vld [vmem:[#allocation7 + $0x1a0] sm:$0xff]
    %v278 = vld [vmem:[#allocation7 + $0x1a8] sm:$0xff]
    %v279 = vld [vmem:[#allocation7 + $0x1b0] sm:$0xff]
    %v280 = vld [vmem:[#allocation7 + $0x1b8] sm:$0xff]
    %v281 = vld [vmem:[#allocation7 + $0x1c0] sm:$0xff]
    %v282 = vld [vmem:[#allocation7 + $0x1c8] sm:$0xff]
    %v283 = vld [vmem:[#allocation7 + $0x1d0] sm:$0xff]
    %v284 = vld [vmem:[#allocation7 + $0x1d8] sm:$0xff]
    %v285 = vld [vmem:[#allocation7 + $0x1e0] sm:$0xff]
    %v286 = vld [vmem:[#allocation7 + $0x1e8] sm:$0xff]
    %v287 = vld [vmem:[#allocation7 + $0x1f0] sm:$0xff]
    %v288 = vld [vmem:[#allocation7 + $0x1f8] sm:$0xff]
    %v289 = vld [vmem:[#allocation8] sm:$0xf]
    %v291 = vlaneseq
    %v292 = vshrl.u32 %v291, 7
    %v293 = vsub.s32 0, %v292
    %v294 = vrot.slane %v289, %v293
    %v295 = vlaneseq
    %v296 = vshrl.u32 %v295, 7
    %v297 = vsub.s32 1, %v296
    %v298 = vrot.slane %v289, %v297
    %v299 = vlaneseq
    %v300 = vshrl.u32 %v299, 7
    %v301 = vsub.s32 2, %v300
    %v302 = vrot.slane %v289, %v301
    %v303 = vlaneseq
    %v304 = vshrl.u32 %v303, 7
    %v305 = vsub.s32 3, %v304
    %v306 = vrot.slane %v289, %v305
    %v375 = vunpack.c.l.b16 %v225
    %v376 = vunpack.c.h.b16 %v225
    %v377 = vunpack.c.l.b16 %v226
    %v378 = vunpack.c.h.b16 %v226
    %v379 = vunpack.c.l.b16 %v227
    %v380 = vunpack.c.h.b16 %v227
    %v381 = vunpack.c.l.b16 %v228
    %v382 = vunpack.c.h.b16 %v228
    %v383 = vunpack.c.l.b16 %v229
    %v384 = vunpack.c.h.b16 %v229
    %v385 = vunpack.c.l.b16 %v230
    %v386 = vunpack.c.h.b16 %v230
    %v387 = vunpack.c.l.b16 %v231
    %v388 = vunpack.c.h.b16 %v231
    %v389 = vunpack.c.l.b16 %v232
    %v390 = vunpack.c.h.b16 %v232
    %v391 = vunpack.c.l.b16 %v233
    %v392 = vunpack.c.h.b16 %v233
    %v393 = vunpack.c.l.b16 %v234
    %v394 = vunpack.c.h.b16 %v234
    %v395 = vunpack.c.l.b16 %v235
    %v396 = vunpack.c.h.b16 %v235
    %v397 = vunpack.c.l.b16 %v236
    %v398 = vunpack.c.h.b16 %v236
    %v399 = vunpack.c.l.b16 %v237
    %v400 = vunpack.c.h.b16 %v237
    %v401 = vunpack.c.l.b16 %v238
    %v402 = vunpack.c.h.b16 %v238
    %v403 = vunpack.c.l.b16 %v239
    %v404 = vunpack.c.h.b16 %v239
    %v405 = vunpack.c.l.b16 %v240
    %v406 = vunpack.c.h.b16 %v240
    %v407 = vunpack.c.l.b16 %v241
    %v408 = vunpack.c.h.b16 %v241
    %v409 = vunpack.c.l.b16 %v242
    %v410 = vunpack.c.h.b16 %v242
    %v411 = vunpack.c.l.b16 %v243
    %v412 = vunpack.c.h.b16 %v243
    %v413 = vunpack.c.l.b16 %v244
    %v414 = vunpack.c.h.b16 %v244
    %v415 = vunpack.c.l.b16 %v245
    %v416 = vunpack.c.h.b16 %v245
    %v417 = vunpack.c.l.b16 %v246
    %v418 = vunpack.c.h.b16 %v246
    %v419 = vunpack.c.l.b16 %v247
    %v420 = vunpack.c.h.b16 %v247
    %v421 = vunpack.c.l.b16 %v248
    %v422 = vunpack.c.h.b16 %v248
    %v423 = vunpack.c.l.b16 %v249
    %v424 = vunpack.c.h.b16 %v249
    %v425 = vunpack.c.l.b16 %v250
    %v426 = vunpack.c.h.b16 %v250
    %v427 = vunpack.c.l.b16 %v251
    %v428 = vunpack.c.h.b16 %v251
    %v429 = vunpack.c.l.b16 %v252
    %v430 = vunpack.c.h.b16 %v252
    %v431 = vunpack.c.l.b16 %v253
    %v432 = vunpack.c.h.b16 %v253
    %v433 = vunpack.c.l.b16 %v254
    %v434 = vunpack.c.h.b16 %v254
    %v435 = vunpack.c.l.b16 %v255
    %v436 = vunpack.c.h.b16 %v255
    %v437 = vunpack.c.l.b16 %v256
    %v438 = vunpack.c.h.b16 %v256
    %v439 = vunpack.c.l.b16 %v257
    %v440 = vunpack.c.h.b16 %v257
    %v441 = vunpack.c.l.b16 %v258
    %v442 = vunpack.c.h.b16 %v258
    %v443 = vunpack.c.l.b16 %v259
    %v444 = vunpack.c.h.b16 %v259
    %v445 = vunpack.c.l.b16 %v260
    %v446 = vunpack.c.h.b16 %v260
    %v447 = vunpack.c.l.b16 %v261
    %v448 = vunpack.c.h.b16 %v261
    %v449 = vunpack.c.l.b16 %v262
    %v450 = vunpack.c.h.b16 %v262
    %v451 = vunpack.c.l.b16 %v263
    %v452 = vunpack.c.h.b16 %v263
    %v453 = vunpack.c.l.b16 %v264
    %v454 = vunpack.c.h.b16 %v264
    %v455 = vunpack.c.l.b16 %v265
    %v456 = vunpack.c.h.b16 %v265
    %v457 = vunpack.c.l.b16 %v266
    %v458 = vunpack.c.h.b16 %v266
    %v459 = vunpack.c.l.b16 %v267
    %v460 = vunpack.c.h.b16 %v267
    %v461 = vunpack.c.l.b16 %v268
    %v462 = vunpack.c.h.b16 %v268
    %v463 = vunpack.c.l.b16 %v269
    %v464 = vunpack.c.h.b16 %v269
    %v465 = vunpack.c.l.b16 %v270
    %v466 = vunpack.c.h.b16 %v270
    %v467 = vunpack.c.l.b16 %v271
    %v468 = vunpack.c.h.b16 %v271
    %v469 = vunpack.c.l.b16 %v272
    %v470 = vunpack.c.h.b16 %v272
    %v471 = vunpack.c.l.b16 %v273
    %v472 = vunpack.c.h.b16 %v273
    %v473 = vunpack.c.l.b16 %v274
    %v474 = vunpack.c.h.b16 %v274
    %v475 = vunpack.c.l.b16 %v275
    %v476 = vunpack.c.h.b16 %v275
    %v477 = vunpack.c.l.b16 %v276
    %v478 = vunpack.c.h.b16 %v276
    %v479 = vunpack.c.l.b16 %v277
    %v480 = vunpack.c.h.b16 %v277
    %v481 = vunpack.c.l.b16 %v278
    %v482 = vunpack.c.h.b16 %v278
    %v483 = vunpack.c.l.b16 %v279
    %v484 = vunpack.c.h.b16 %v279
    %v485 = vunpack.c.l.b16 %v280
    %v486 = vunpack.c.h.b16 %v280
    %v487 = vunpack.c.l.b16 %v281
    %v488 = vunpack.c.h.b16 %v281
    %v489 = vunpack.c.l.b16 %v282
    %v490 = vunpack.c.h.b16 %v282
    %v491 = vunpack.c.l.b16 %v283
    %v492 = vunpack.c.h.b16 %v283
    %v493 = vunpack.c.l.b16 %v284
    %v494 = vunpack.c.h.b16 %v284
    %v495 = vunpack.c.l.b16 %v285
    %v496 = vunpack.c.h.b16 %v285
    %v497 = vunpack.c.l.b16 %v286
    %v498 = vunpack.c.h.b16 %v286
    %v499 = vunpack.c.l.b16 %v287
    %v500 = vunpack.c.h.b16 %v287
    %v501 = vunpack.c.l.b16 %v288
    %v502 = vunpack.c.h.b16 %v288
    %v503 = vpack.c.b16 %v379, %v375
    %v504 = vpack.c.b16 %v380, %v376
    %v505 = vpack.c.b16 %v381, %v377
    %v506 = vpack.c.b16 %v382, %v378
    %v507 = vpack.c.b16 %v387, %v383
    %v508 = vpack.c.b16 %v388, %v384
    %v509 = vpack.c.b16 %v389, %v385
    %v510 = vpack.c.b16 %v390, %v386
    %v511 = vpack.c.b16 %v395, %v391
    %v512 = vpack.c.b16 %v396, %v392
    %v513 = vpack.c.b16 %v397, %v393
    %v514 = vpack.c.b16 %v398, %v394
    %v515 = vpack.c.b16 %v403, %v399
    %v516 = vpack.c.b16 %v404, %v400
    %v517 = vpack.c.b16 %v405, %v401
    %v518 = vpack.c.b16 %v406, %v402
    %v519 = vpack.c.b16 %v411, %v407
    %v520 = vpack.c.b16 %v412, %v408
    %v521 = vpack.c.b16 %v413, %v409
    %v522 = vpack.c.b16 %v414, %v410
    %v523 = vpack.c.b16 %v419, %v415
    %v524 = vpack.c.b16 %v420, %v416
    %v525 = vpack.c.b16 %v421, %v417
    %v526 = vpack.c.b16 %v422, %v418
    %v527 = vpack.c.b16 %v427, %v423
    %v528 = vpack.c.b16 %v428, %v424
    %v529 = vpack.c.b16 %v429, %v425
    %v530 = vpack.c.b16 %v430, %v426
    %v531 = vpack.c.b16 %v435, %v431
    %v532 = vpack.c.b16 %v436, %v432
    %v533 = vpack.c.b16 %v437, %v433
    %v534 = vpack.c.b16 %v438, %v434
    %v535 = vpack.c.b16 %v443, %v439
    %v536 = vpack.c.b16 %v444, %v440
    %v537 = vpack.c.b16 %v445, %v441
    %v538 = vpack.c.b16 %v446, %v442
    %v539 = vpack.c.b16 %v451, %v447
    %v540 = vpack.c.b16 %v452, %v448
    %v541 = vpack.c.b16 %v453, %v449
    %v542 = vpack.c.b16 %v454, %v450
    %v543 = vpack.c.b16 %v459, %v455
    %v544 = vpack.c.b16 %v460, %v456
    %v545 = vpack.c.b16 %v461, %v457
    %v546 = vpack.c.b16 %v462, %v458
    %v547 = vpack.c.b16 %v467, %v463
    %v548 = vpack.c.b16 %v468, %v464
    %v549 = vpack.c.b16 %v469, %v465
    %v550 = vpack.c.b16 %v470, %v466
    %v551 = vpack.c.b16 %v475, %v471
    %v552 = vpack.c.b16 %v476, %v472
    %v553 = vpack.c.b16 %v477, %v473
    %v554 = vpack.c.b16 %v478, %v474
    %v555 = vpack.c.b16 %v483, %v479
    %v556 = vpack.c.b16 %v484, %v480
    %v557 = vpack.c.b16 %v485, %v481
    %v558 = vpack.c.b16 %v486, %v482
    %v559 = vpack.c.b16 %v491, %v487
    %v560 = vpack.c.b16 %v492, %v488
    %v561 = vpack.c.b16 %v493, %v489
    %v562 = vpack.c.b16 %v494, %v490
    %v563 = vpack.c.b16 %v499, %v495
    %v564 = vpack.c.b16 %v500, %v496
    %v565 = vpack.c.b16 %v501, %v497
    %v566 = vpack.c.b16 %v502, %v498
    %631 = vmatprep.subr.bf16.mxu0 %v532
    %632 = vmatpush1.bf16.msra.mxu0 %v531
    %633 = vmatprep.subr.bf16.mxu0 %v528
    %634 = vmatpush1.bf16.msra.mxu0 %v527
    %635 = vmatprep.subr.bf16.mxu0 %v524
    %636 = vmatpush1.bf16.msra.mxu0 %v523
    %637 = vmatprep.subr.bf16.mxu0 %v520
    %638 = vmatpush1.bf16.msra.mxu0 %v519
    %639 = vmatprep.subr.bf16.mxu0 %v516
    %640 = vmatpush1.bf16.msra.mxu0 %v515
    %641 = vmatprep.subr.bf16.mxu0 %v512
    %642 = vmatpush1.bf16.msra.mxu0 %v511
    %643 = vmatprep.subr.bf16.mxu0 %v508
    %644 = vmatpush1.bf16.msra.mxu0 %v507
    %645 = vmatprep.subr.bf16.mxu0 %v504
    %646 = vmatpush1.bf16.msra.mxu0 %v503
    %647 = vmatprep.subr.bf16.mxu0 %v564
    %648 = vmatpush2.bf16.msra.mxu0 %v563
    %649 = vmatprep.subr.bf16.mxu0 %v560
    %650 = vmatpush2.bf16.msra.mxu0 %v559
    %651 = vmatprep.subr.bf16.mxu0 %v556
    %652 = vmatpush2.bf16.msra.mxu0 %v555
    %653 = vmatprep.subr.bf16.mxu0 %v552
    %654 = vmatpush2.bf16.msra.mxu0 %v551
    %655 = vmatprep.subr.bf16.mxu0 %v548
    %656 = vmatpush2.bf16.msra.mxu0 %v547
    %657 = vmatprep.subr.bf16.mxu0 %v544
    %658 = vmatpush2.bf16.msra.mxu0 %v543
    %659 = vmatprep.subr.bf16.mxu0 %v540
    %660 = vmatpush2.bf16.msra.mxu0 %v539
    %661 = vmatprep.subr.bf16.mxu0 %v536
    %662 = vmatpush2.bf16.msra.mxu0 %v535
    %663 = vmatprep.mubr.bf16.mxu0 %v224
    %664 = vmatmul.mubr.bf16.gmra.mxu0 %v223
    %v665 = vpop.f32.mrf.mxu0
    %v666 = vadd.f32 %v294, %v665
    %v667 = vpop.f32.mrf.mxu0
    %v668 = vadd.f32 %v298, %v667
    %v669 = vpop.f32.mrf.mxu0
    %v670 = vpop.f32.mrf.mxu0
    %671 = vdwg.mxu0
    %672 = vmatprep.subr.bf16.mxu0 %v534
    %673 = vmatpush1.bf16.msra.mxu0 %v533
    %674 = vmatprep.subr.bf16.mxu0 %v530
    %675 = vmatpush1.bf16.msra.mxu0 %v529
    %676 = vmatprep.subr.bf16.mxu0 %v526
    %677 = vmatpush1.bf16.msra.mxu0 %v525
    %678 = vmatprep.subr.bf16.mxu0 %v522
    %679 = vmatpush1.bf16.msra.mxu0 %v521
    %680 = vmatprep.subr.bf16.mxu0 %v518
    %681 = vmatpush1.bf16.msra.mxu0 %v517
    %682 = vmatprep.subr.bf16.mxu0 %v514
    %683 = vmatpush1.bf16.msra.mxu0 %v513
    %684 = vmatprep.subr.bf16.mxu0 %v510
    %685 = vmatpush1.bf16.msra.mxu0 %v509
    %686 = vmatprep.subr.bf16.mxu0 %v506
    %687 = vmatpush1.bf16.msra.mxu0 %v505
    %688 = vmatprep.subr.bf16.mxu0 %v566
    %689 = vmatpush2.bf16.msra.mxu0 %v565
    %690 = vmatprep.subr.bf16.mxu0 %v562
    %691 = vmatpush2.bf16.msra.mxu0 %v561
    %692 = vmatprep.subr.bf16.mxu0 %v558
    %693 = vmatpush2.bf16.msra.mxu0 %v557
    %694 = vmatprep.subr.bf16.mxu0 %v554
    %695 = vmatpush2.bf16.msra.mxu0 %v553
    %696 = vmatprep.subr.bf16.mxu0 %v550
    %697 = vmatpush2.bf16.msra.mxu0 %v549
    %698 = vmatprep.subr.bf16.mxu0 %v546
    %699 = vmatpush2.bf16.msra.mxu0 %v545
    %700 = vmatprep.subr.bf16.mxu0 %v542
    %701 = vmatpush2.bf16.msra.mxu0 %v541
    %702 = vmatprep.subr.bf16.mxu0 %v538
    %703 = vmatpush2.bf16.msra.mxu0 %v537
    %704 = vmatprep.mubr.bf16.mxu0 %v224
    %705 = vmatmul.mubr.bf16.gmra.mxu0 %v223
    %v706 = vpop.f32.mrf.mxu0
    %v707 = vadd.f32 %v302, %v706
    %v708 = vpop.f32.mrf.mxu0
    %v709 = vadd.f32 %v306, %v708
    %v710 = vpop.f32.mrf.mxu0
    %v711 = vpop.f32.mrf.mxu0
    %712 = vdwg.mxu0
    %v713 = vmul.f32 %v666, 0.2
    %v714 = vmul.f32 %v668, 0.2
    %v715 = vmul.f32 %v707, 0.2
    %v716 = vmul.f32 %v709, 0.2
    %v717 = vmax.f32 %v666, %v713
    %v718 = vmax.f32 %v668, %v714
    %v719 = vmax.f32 %v707, %v715
    %v720 = vmax.f32 %v709, %v716
    %v721 = vpack.c.bf16 %v717, %v717
    %v722 = vpack.c.bf16 %v718, %v718
    %v723 = vpack.c.bf16 %v719, %v719
    %v724 = vpack.c.bf16 %v720, %v720
    %v725 = vld [vmem:[#allocation10] sm:$0xff]
    %v726 = vld [vmem:[#allocation10 + $0x8] sm:$0xff]
    %v727 = vld [vmem:[#allocation10 + $0x10] sm:$0xff]
    %v728 = vld [vmem:[#allocation10 + $0x18] sm:$0xff]
    %v729 = vld [vmem:[#allocation10 + $0x20] sm:$0xff]
    %v730 = vld [vmem:[#allocation10 + $0x28] sm:$0xff]
    %v731 = vld [vmem:[#allocation10 + $0x30] sm:$0xff]
    %v732 = vld [vmem:[#allocation10 + $0x38] sm:$0xff]
    %v733 = vld [vmem:[#allocation10 + $0x40] sm:$0xff]
    %v734 = vld [vmem:[#allocation10 + $0x48] sm:$0xff]
    %v735 = vld [vmem:[#allocation10 + $0x50] sm:$0xff]
    %v736 = vld [vmem:[#allocation10 + $0x58] sm:$0xff]
    %v737 = vld [vmem:[#allocation10 + $0x60] sm:$0xff]
    %v738 = vld [vmem:[#allocation10 + $0x68] sm:$0xff]
    %v739 = vld [vmem:[#allocation10 + $0x70] sm:$0xff]
    %v740 = vld [vmem:[#allocation10 + $0x78] sm:$0xff]
    %v741 = vld [vmem:[#allocation10 + $0x80] sm:$0xff]
    %v742 = vld [vmem:[#allocation10 + $0x88] sm:$0xff]
    %v743 = vld [vmem:[#allocation10 + $0x90] sm:$0xff]
    %v744 = vld [vmem:[#allocation10 + $0x98] sm:$0xff]
    %v745 = vld [vmem:[#allocation10 + $0xa0] sm:$0xff]
    %v746 = vld [vmem:[#allocation10 + $0xa8] sm:$0xff]
    %v747 = vld [vmem:[#allocation10 + $0xb0] sm:$0xff]
    %v748 = vld [vmem:[#allocation10 + $0xb8] sm:$0xff]
    %v749 = vld [vmem:[#allocation10 + $0xc0] sm:$0xff]
    %v750 = vld [vmem:[#allocation10 + $0xc8] sm:$0xff]
    %v751 = vld [vmem:[#allocation10 + $0xd0] sm:$0xff]
    %v752 = vld [vmem:[#allocation10 + $0xd8] sm:$0xff]
    %v753 = vld [vmem:[#allocation10 + $0xe0] sm:$0xff]
    %v754 = vld [vmem:[#allocation10 + $0xe8] sm:$0xff]
    %v755 = vld [vmem:[#allocation10 + $0xf0] sm:$0xff]
    %v756 = vld [vmem:[#allocation10 + $0xf8] sm:$0xff]
    %v757 = vld [vmem:[#allocation10 + $0x100] sm:$0xff]
    %v758 = vld [vmem:[#allocation10 + $0x108] sm:$0xff]
    %v759 = vld [vmem:[#allocation10 + $0x110] sm:$0xff]
    %v760 = vld [vmem:[#allocation10 + $0x118] sm:$0xff]
    %v761 = vld [vmem:[#allocation10 + $0x120] sm:$0xff]
    %v762 = vld [vmem:[#allocation10 + $0x128] sm:$0xff]
    %v763 = vld [vmem:[#allocation10 + $0x130] sm:$0xff]
    %v764 = vld [vmem:[#allocation10 + $0x138] sm:$0xff]
    %v765 = vld [vmem:[#allocation10 + $0x140] sm:$0xff]
    %v766 = vld [vmem:[#allocation10 + $0x148] sm:$0xff]
    %v767 = vld [vmem:[#allocation10 + $0x150] sm:$0xff]
    %v768 = vld [vmem:[#allocation10 + $0x158] sm:$0xff]
    %v769 = vld [vmem:[#allocation10 + $0x160] sm:$0xff]
    %v770 = vld [vmem:[#allocation10 + $0x168] sm:$0xff]
    %v771 = vld [vmem:[#allocation10 + $0x170] sm:$0xff]
    %v772 = vld [vmem:[#allocation10 + $0x178] sm:$0xff]
    %v773 = vld [vmem:[#allocation10 + $0x180] sm:$0xff]
    %v774 = vld [vmem:[#allocation10 + $0x188] sm:$0xff]
    %v775 = vld [vmem:[#allocation10 + $0x190] sm:$0xff]
    %v776 = vld [vmem:[#allocation10 + $0x198] sm:$0xff]
    %v777 = vld [vmem:[#allocation10 + $0x1a0] sm:$0xff]
    %v778 = vld [vmem:[#allocation10 + $0x1a8] sm:$0xff]
    %v779 = vld [vmem:[#allocation10 + $0x1b0] sm:$0xff]
    %v780 = vld [vmem:[#allocation10 + $0x1b8] sm:$0xff]
    %v781 = vld [vmem:[#allocation10 + $0x1c0] sm:$0xff]
    %v782 = vld [vmem:[#allocation10 + $0x1c8] sm:$0xff]
    %v783 = vld [vmem:[#allocation10 + $0x1d0] sm:$0xff]
    %v784 = vld [vmem:[#allocation10 + $0x1d8] sm:$0xff]
    %v785 = vld [vmem:[#allocation10 + $0x1e0] sm:$0xff]
    %v786 = vld [vmem:[#allocation10 + $0x1e8] sm:$0xff]
    %v787 = vld [vmem:[#allocation10 + $0x1f0] sm:$0xff]
    %v788 = vld [vmem:[#allocation10 + $0x1f8] sm:$0xff]
    %v789 = vld [vmem:[#allocation10 + $0x200] sm:$0xff]
    %v790 = vld [vmem:[#allocation10 + $0x208] sm:$0xff]
    %v791 = vld [vmem:[#allocation10 + $0x210] sm:$0xff]
    %v792 = vld [vmem:[#allocation10 + $0x218] sm:$0xff]
    %v793 = vld [vmem:[#allocation10 + $0x220] sm:$0xff]
    %v794 = vld [vmem:[#allocation10 + $0x228] sm:$0xff]
    %v795 = vld [vmem:[#allocation10 + $0x230] sm:$0xff]
    %v796 = vld [vmem:[#allocation10 + $0x238] sm:$0xff]
    %v797 = vld [vmem:[#allocation10 + $0x240] sm:$0xff]
    %v798 = vld [vmem:[#allocation10 + $0x248] sm:$0xff]
    %v799 = vld [vmem:[#allocation10 + $0x250] sm:$0xff]
    %v800 = vld [vmem:[#allocation10 + $0x258] sm:$0xff]
    %v801 = vld [vmem:[#allocation10 + $0x260] sm:$0xff]
    %v802 = vld [vmem:[#allocation10 + $0x268] sm:$0xff]
    %v803 = vld [vmem:[#allocation10 + $0x270] sm:$0xff]
    %v804 = vld [vmem:[#allocation10 + $0x278] sm:$0xff]
    %v805 = vld [vmem:[#allocation10 + $0x280] sm:$0xff]
    %v806 = vld [vmem:[#allocation10 + $0x288] sm:$0xff]
    %v807 = vld [vmem:[#allocation10 + $0x290] sm:$0xff]
    %v808 = vld [vmem:[#allocation10 + $0x298] sm:$0xff]
    %v809 = vld [vmem:[#allocation10 + $0x2a0] sm:$0xff]
    %v810 = vld [vmem:[#allocation10 + $0x2a8] sm:$0xff]
    %v811 = vld [vmem:[#allocation10 + $0x2b0] sm:$0xff]
    %v812 = vld [vmem:[#allocation10 + $0x2b8] sm:$0xff]
    %v813 = vld [vmem:[#allocation10 + $0x2c0] sm:$0xff]
    %v814 = vld [vmem:[#allocation10 + $0x2c8] sm:$0xff]
    %v815 = vld [vmem:[#allocation10 + $0x2d0] sm:$0xff]
    %v816 = vld [vmem:[#allocation10 + $0x2d8] sm:$0xff]
    %v817 = vld [vmem:[#allocation10 + $0x2e0] sm:$0xff]
    %v818 = vld [vmem:[#allocation10 + $0x2e8] sm:$0xff]
    %v819 = vld [vmem:[#allocation10 + $0x2f0] sm:$0xff]
    %v820 = vld [vmem:[#allocation10 + $0x2f8] sm:$0xff]
    %v821 = vld [vmem:[#allocation10 + $0x300] sm:$0xff]
    %v822 = vld [vmem:[#allocation10 + $0x308] sm:$0xff]
    %v823 = vld [vmem:[#allocation10 + $0x310] sm:$0xff]
    %v824 = vld [vmem:[#allocation10 + $0x318] sm:$0xff]
    %v825 = vld [vmem:[#allocation10 + $0x320] sm:$0xff]
    %v826 = vld [vmem:[#allocation10 + $0x328] sm:$0xff]
    %v827 = vld [vmem:[#allocation10 + $0x330] sm:$0xff]
    %v828 = vld [vmem:[#allocation10 + $0x338] sm:$0xff]
    %v829 = vld [vmem:[#allocation10 + $0x340] sm:$0xff]
    %v830 = vld [vmem:[#allocation10 + $0x348] sm:$0xff]
    %v831 = vld [vmem:[#allocation10 + $0x350] sm:$0xff]
    %v832 = vld [vmem:[#allocation10 + $0x358] sm:$0xff]
    %v833 = vld [vmem:[#allocation10 + $0x360] sm:$0xff]
    %v834 = vld [vmem:[#allocation10 + $0x368] sm:$0xff]
    %v835 = vld [vmem:[#allocation10 + $0x370] sm:$0xff]
    %v836 = vld [vmem:[#allocation10 + $0x378] sm:$0xff]
    %v837 = vld [vmem:[#allocation10 + $0x380] sm:$0xff]
    %v838 = vld [vmem:[#allocation10 + $0x388] sm:$0xff]
    %v839 = vld [vmem:[#allocation10 + $0x390] sm:$0xff]
    %v840 = vld [vmem:[#allocation10 + $0x398] sm:$0xff]
    %v841 = vld [vmem:[#allocation10 + $0x3a0] sm:$0xff]
    %v842 = vld [vmem:[#allocation10 + $0x3a8] sm:$0xff]
    %v843 = vld [vmem:[#allocation10 + $0x3b0] sm:$0xff]
    %v844 = vld [vmem:[#allocation10 + $0x3b8] sm:$0xff]
    %v845 = vld [vmem:[#allocation10 + $0x3c0] sm:$0xff]
    %v846 = vld [vmem:[#allocation10 + $0x3c8] sm:$0xff]
    %v847 = vld [vmem:[#allocation10 + $0x3d0] sm:$0xff]
    %v848 = vld [vmem:[#allocation10 + $0x3d8] sm:$0xff]
    %v849 = vld [vmem:[#allocation10 + $0x3e0] sm:$0xff]
    %v850 = vld [vmem:[#allocation10 + $0x3e8] sm:$0xff]
    %v851 = vld [vmem:[#allocation10 + $0x3f0] sm:$0xff]
    %v852 = vld [vmem:[#allocation10 + $0x3f8] sm:$0xff]
    %v853 = vld [vmem:[#allocation10 + $0x400] sm:$0xff]
    %v854 = vld [vmem:[#allocation10 + $0x408] sm:$0xff]
    %v855 = vld [vmem:[#allocation10 + $0x410] sm:$0xff]
    %v856 = vld [vmem:[#allocation10 + $0x418] sm:$0xff]
    %v857 = vld [vmem:[#allocation10 + $0x420] sm:$0xff]
    %v858 = vld [vmem:[#allocation10 + $0x428] sm:$0xff]
    %v859 = vld [vmem:[#allocation10 + $0x430] sm:$0xff]
    %v860 = vld [vmem:[#allocation10 + $0x438] sm:$0xff]
    %v861 = vld [vmem:[#allocation10 + $0x440] sm:$0xff]
    %v862 = vld [vmem:[#allocation10 + $0x448] sm:$0xff]
    %v863 = vld [vmem:[#allocation10 + $0x450] sm:$0xff]
    %v864 = vld [vmem:[#allocation10 + $0x458] sm:$0xff]
    %v865 = vld [vmem:[#allocation10 + $0x460] sm:$0xff]
    %v866 = vld [vmem:[#allocation10 + $0x468] sm:$0xff]
    %v867 = vld [vmem:[#allocation10 + $0x470] sm:$0xff]
    %v868 = vld [vmem:[#allocation10 + $0x478] sm:$0xff]
    %v869 = vld [vmem:[#allocation10 + $0x480] sm:$0xff]
    %v870 = vld [vmem:[#allocation10 + $0x488] sm:$0xff]
    %v871 = vld [vmem:[#allocation10 + $0x490] sm:$0xff]
    %v872 = vld [vmem:[#allocation10 + $0x498] sm:$0xff]
    %v873 = vld [vmem:[#allocation10 + $0x4a0] sm:$0xff]
    %v874 = vld [vmem:[#allocation10 + $0x4a8] sm:$0xff]
    %v875 = vld [vmem:[#allocation10 + $0x4b0] sm:$0xff]
    %v876 = vld [vmem:[#allocation10 + $0x4b8] sm:$0xff]
    %v877 = vld [vmem:[#allocation10 + $0x4c0] sm:$0xff]
    %v878 = vld [vmem:[#allocation10 + $0x4c8] sm:$0xff]
    %v879 = vld [vmem:[#allocation10 + $0x4d0] sm:$0xff]
    %v880 = vld [vmem:[#allocation10 + $0x4d8] sm:$0xff]
    %v881 = vld [vmem:[#allocation10 + $0x4e0] sm:$0xff]
    %v882 = vld [vmem:[#allocation10 + $0x4e8] sm:$0xff]
    %v883 = vld [vmem:[#allocation10 + $0x4f0] sm:$0xff]
    %v884 = vld [vmem:[#allocation10 + $0x4f8] sm:$0xff]
    %v885 = vld [vmem:[#allocation10 + $0x500] sm:$0xff]
    %v886 = vld [vmem:[#allocation10 + $0x508] sm:$0xff]
    %v887 = vld [vmem:[#allocation10 + $0x510] sm:$0xff]
    %v888 = vld [vmem:[#allocation10 + $0x518] sm:$0xff]
    %v889 = vld [vmem:[#allocation10 + $0x520] sm:$0xff]
    %v890 = vld [vmem:[#allocation10 + $0x528] sm:$0xff]
    %v891 = vld [vmem:[#allocation10 + $0x530] sm:$0xff]
    %v892 = vld [vmem:[#allocation10 + $0x538] sm:$0xff]
    %v893 = vld [vmem:[#allocation10 + $0x540] sm:$0xff]
    %v894 = vld [vmem:[#allocation10 + $0x548] sm:$0xff]
    %v895 = vld [vmem:[#allocation10 + $0x550] sm:$0xff]
    %v896 = vld [vmem:[#allocation10 + $0x558] sm:$0xff]
    %v897 = vld [vmem:[#allocation10 + $0x560] sm:$0xff]
    %v898 = vld [vmem:[#allocation10 + $0x568] sm:$0xff]
    %v899 = vld [vmem:[#allocation10 + $0x570] sm:$0xff]
    %v900 = vld [vmem:[#allocation10 + $0x578] sm:$0xff]
    %v901 = vld [vmem:[#allocation10 + $0x580] sm:$0xff]
    %v902 = vld [vmem:[#allocation10 + $0x588] sm:$0xff]
    %v903 = vld [vmem:[#allocation10 + $0x590] sm:$0xff]
    %v904 = vld [vmem:[#allocation10 + $0x598] sm:$0xff]
    %v905 = vld [vmem:[#allocation10 + $0x5a0] sm:$0xff]
    %v906 = vld [vmem:[#allocation10 + $0x5a8] sm:$0xff]
    %v907 = vld [vmem:[#allocation10 + $0x5b0] sm:$0xff]
    %v908 = vld [vmem:[#allocation10 + $0x5b8] sm:$0xff]
    %v909 = vld [vmem:[#allocation10 + $0x5c0] sm:$0xff]
    %v910 = vld [vmem:[#allocation10 + $0x5c8] sm:$0xff]
    %v911 = vld [vmem:[#allocation10 + $0x5d0] sm:$0xff]
    %v912 = vld [vmem:[#allocation10 + $0x5d8] sm:$0xff]
    %v913 = vld [vmem:[#allocation10 + $0x5e0] sm:$0xff]
    %v914 = vld [vmem:[#allocation10 + $0x5e8] sm:$0xff]
    %v915 = vld [vmem:[#allocation10 + $0x5f0] sm:$0xff]
    %v916 = vld [vmem:[#allocation10 + $0x5f8] sm:$0xff]
    %v917 = vld [vmem:[#allocation10 + $0x600] sm:$0xff]
    %v918 = vld [vmem:[#allocation10 + $0x608] sm:$0xff]
    %v919 = vld [vmem:[#allocation10 + $0x610] sm:$0xff]
    %v920 = vld [vmem:[#allocation10 + $0x618] sm:$0xff]
    %v921 = vld [vmem:[#allocation10 + $0x620] sm:$0xff]
    %v922 = vld [vmem:[#allocation10 + $0x628] sm:$0xff]
    %v923 = vld [vmem:[#allocation10 + $0x630] sm:$0xff]
    %v924 = vld [vmem:[#allocation10 + $0x638] sm:$0xff]
    %v925 = vld [vmem:[#allocation10 + $0x640] sm:$0xff]
    %v926 = vld [vmem:[#allocation10 + $0x648] sm:$0xff]
    %v927 = vld [vmem:[#allocation10 + $0x650] sm:$0xff]
    %v928 = vld [vmem:[#allocation10 + $0x658] sm:$0xff]
    %v929 = vld [vmem:[#allocation10 + $0x660] sm:$0xff]
    %v930 = vld [vmem:[#allocation10 + $0x668] sm:$0xff]
    %v931 = vld [vmem:[#allocation10 + $0x670] sm:$0xff]
    %v932 = vld [vmem:[#allocation10 + $0x678] sm:$0xff]
    %v933 = vld [vmem:[#allocation10 + $0x680] sm:$0xff]
    %v934 = vld [vmem:[#allocation10 + $0x688] sm:$0xff]
    %v935 = vld [vmem:[#allocation10 + $0x690] sm:$0xff]
    %v936 = vld [vmem:[#allocation10 + $0x698] sm:$0xff]
    %v937 = vld [vmem:[#allocation10 + $0x6a0] sm:$0xff]
    %v938 = vld [vmem:[#allocation10 + $0x6a8] sm:$0xff]
    %v939 = vld [vmem:[#allocation10 + $0x6b0] sm:$0xff]
    %v940 = vld [vmem:[#allocation10 + $0x6b8] sm:$0xff]
    %v941 = vld [vmem:[#allocation10 + $0x6c0] sm:$0xff]
    %v942 = vld [vmem:[#allocation10 + $0x6c8] sm:$0xff]
    %v943 = vld [vmem:[#allocation10 + $0x6d0] sm:$0xff]
    %v944 = vld [vmem:[#allocation10 + $0x6d8] sm:$0xff]
    %v945 = vld [vmem:[#allocation10 + $0x6e0] sm:$0xff]
    %v946 = vld [vmem:[#allocation10 + $0x6e8] sm:$0xff]
    %v947 = vld [vmem:[#allocation10 + $0x6f0] sm:$0xff]
    %v948 = vld [vmem:[#allocation10 + $0x6f8] sm:$0xff]
    %v949 = vld [vmem:[#allocation10 + $0x700] sm:$0xff]
    %v950 = vld [vmem:[#allocation10 + $0x708] sm:$0xff]
    %v951 = vld [vmem:[#allocation10 + $0x710] sm:$0xff]
    %v952 = vld [vmem:[#allocation10 + $0x718] sm:$0xff]
    %v953 = vld [vmem:[#allocation10 + $0x720] sm:$0xff]
    %v954 = vld [vmem:[#allocation10 + $0x728] sm:$0xff]
    %v955 = vld [vmem:[#allocation10 + $0x730] sm:$0xff]
    %v956 = vld [vmem:[#allocation10 + $0x738] sm:$0xff]
    %v957 = vld [vmem:[#allocation10 + $0x740] sm:$0xff]
    %v958 = vld [vmem:[#allocation10 + $0x748] sm:$0xff]
    %v959 = vld [vmem:[#allocation10 + $0x750] sm:$0xff]
    %v960 = vld [vmem:[#allocation10 + $0x758] sm:$0xff]
    %v961 = vld [vmem:[#allocation10 + $0x760] sm:$0xff]
    %v962 = vld [vmem:[#allocation10 + $0x768] sm:$0xff]
    %v963 = vld [vmem:[#allocation10 + $0x770] sm:$0xff]
    %v964 = vld [vmem:[#allocation10 + $0x778] sm:$0xff]
    %v965 = vld [vmem:[#allocation10 + $0x780] sm:$0xff]
    %v966 = vld [vmem:[#allocation10 + $0x788] sm:$0xff]
    %v967 = vld [vmem:[#allocation10 + $0x790] sm:$0xff]
    %v968 = vld [vmem:[#allocation10 + $0x798] sm:$0xff]
    %v969 = vld [vmem:[#allocation10 + $0x7a0] sm:$0xff]
    %v970 = vld [vmem:[#allocation10 + $0x7a8] sm:$0xff]
    %v971 = vld [vmem:[#allocation10 + $0x7b0] sm:$0xff]
    %v972 = vld [vmem:[#allocation10 + $0x7b8] sm:$0xff]
    %v973 = vld [vmem:[#allocation10 + $0x7c0] sm:$0xff]
    %v974 = vld [vmem:[#allocation10 + $0x7c8] sm:$0xff]
    %v975 = vld [vmem:[#allocation10 + $0x7d0] sm:$0xff]
    %v976 = vld [vmem:[#allocation10 + $0x7d8] sm:$0xff]
    %v977 = vld [vmem:[#allocation10 + $0x7e0] sm:$0xff]
    %v978 = vld [vmem:[#allocation10 + $0x7e8] sm:$0xff]
    %v979 = vld [vmem:[#allocation10 + $0x7f0] sm:$0xff]
    %v980 = vld [vmem:[#allocation10 + $0x7f8] sm:$0xff]
    %v981 = vld [vmem:[%s6] sm:$0xff]
    %v983 = vlaneseq
    %v984 = vshrl.u32 %v983, 7
    %v985 = vsub.s32 0, %v984
    %v986 = vrot.slane %v981, %v985
    %v987 = vlaneseq
    %v988 = vshrl.u32 %v987, 7
    %v989 = vsub.s32 1, %v988
    %v990 = vrot.slane %v981, %v989
    %v991 = vlaneseq
    %v992 = vshrl.u32 %v991, 7
    %v993 = vsub.s32 2, %v992
    %v994 = vrot.slane %v981, %v993
    %v995 = vlaneseq
    %v996 = vshrl.u32 %v995, 7
    %v997 = vsub.s32 3, %v996
    %v998 = vrot.slane %v981, %v997
    %v999 = vlaneseq
    %v1000 = vshrl.u32 %v999, 7
    %v1001 = vsub.s32 4, %v1000
    %v1002 = vrot.slane %v981, %v1001
    %v1003 = vlaneseq
    %v1004 = vshrl.u32 %v1003, 7
    %v1005 = vsub.s32 5, %v1004
    %v1006 = vrot.slane %v981, %v1005
    %v1007 = vlaneseq
    %v1008 = vshrl.u32 %v1007, 7
    %v1009 = vsub.s32 6, %v1008
    %v1010 = vrot.slane %v981, %v1009
    %v1011 = vlaneseq
    %v1012 = vshrl.u32 %v1011, 7
    %v1013 = vsub.s32 7, %v1012
    %v1014 = vrot.slane %v981, %v1013
    %v1279 = vunpack.c.l.b16 %v725
    %v1280 = vunpack.c.h.b16 %v725
    %v1281 = vunpack.c.l.b16 %v726
    %v1282 = vunpack.c.h.b16 %v726
    %v1283 = vunpack.c.l.b16 %v727
    %v1284 = vunpack.c.h.b16 %v727
    %v1285 = vunpack.c.l.b16 %v728
    %v1286 = vunpack.c.h.b16 %v728
    %v1287 = vunpack.c.l.b16 %v729
    %v1288 = vunpack.c.h.b16 %v729
    %v1289 = vunpack.c.l.b16 %v730
    %v1290 = vunpack.c.h.b16 %v730
    %v1291 = vunpack.c.l.b16 %v731
    %v1292 = vunpack.c.h.b16 %v731
    %v1293 = vunpack.c.l.b16 %v732
    %v1294 = vunpack.c.h.b16 %v732
    %v1295 = vunpack.c.l.b16 %v733
    %v1296 = vunpack.c.h.b16 %v733
    %v1297 = vunpack.c.l.b16 %v734
    %v1298 = vunpack.c.h.b16 %v734
    %v1299 = vunpack.c.l.b16 %v735
    %v1300 = vunpack.c.h.b16 %v735
    %v1301 = vunpack.c.l.b16 %v736
    %v1302 = vunpack.c.h.b16 %v736
    %v1303 = vunpack.c.l.b16 %v737
    %v1304 = vunpack.c.h.b16 %v737
    %v1305 = vunpack.c.l.b16 %v738
    %v1306 = vunpack.c.h.b16 %v738
    %v1307 = vunpack.c.l.b16 %v739
    %v1308 = vunpack.c.h.b16 %v739
    %v1309 = vunpack.c.l.b16 %v740
    %v1310 = vunpack.c.h.b16 %v740
    %v1311 = vunpack.c.l.b16 %v741
    %v1312 = vunpack.c.h.b16 %v741
    %v1313 = vunpack.c.l.b16 %v742
    %v1314 = vunpack.c.h.b16 %v742
    %v1315 = vunpack.c.l.b16 %v743
    %v1316 = vunpack.c.h.b16 %v743
    %v1317 = vunpack.c.l.b16 %v744
    %v1318 = vunpack.c.h.b16 %v744
    %v1319 = vunpack.c.l.b16 %v745
    %v1320 = vunpack.c.h.b16 %v745
    %v1321 = vunpack.c.l.b16 %v746
    %v1322 = vunpack.c.h.b16 %v746
    %v1323 = vunpack.c.l.b16 %v747
    %v1324 = vunpack.c.h.b16 %v747
    %v1325 = vunpack.c.l.b16 %v748
    %v1326 = vunpack.c.h.b16 %v748
    %v1327 = vunpack.c.l.b16 %v749
    %v1328 = vunpack.c.h.b16 %v749
    %v1329 = vunpack.c.l.b16 %v750
    %v1330 = vunpack.c.h.b16 %v750
    %v1331 = vunpack.c.l.b16 %v751
    %v1332 = vunpack.c.h.b16 %v751
    %v1333 = vunpack.c.l.b16 %v752
    %v1334 = vunpack.c.h.b16 %v752
    %v1335 = vunpack.c.l.b16 %v753
    %v1336 = vunpack.c.h.b16 %v753
    %v1337 = vunpack.c.l.b16 %v754
    %v1338 = vunpack.c.h.b16 %v754
    %v1339 = vunpack.c.l.b16 %v755
    %v1340 = vunpack.c.h.b16 %v755
    %v1341 = vunpack.c.l.b16 %v756
    %v1342 = vunpack.c.h.b16 %v756
    %v1343 = vunpack.c.l.b16 %v757
    %v1344 = vunpack.c.h.b16 %v757
    %v1345 = vunpack.c.l.b16 %v758
    %v1346 = vunpack.c.h.b16 %v758
    %v1347 = vunpack.c.l.b16 %v759
    %v1348 = vunpack.c.h.b16 %v759
    %v1349 = vunpack.c.l.b16 %v760
    %v1350 = vunpack.c.h.b16 %v760
    %v1351 = vunpack.c.l.b16 %v761
    %v1352 = vunpack.c.h.b16 %v761
    %v1353 = vunpack.c.l.b16 %v762
    %v1354 = vunpack.c.h.b16 %v762
    %v1355 = vunpack.c.l.b16 %v763
    %v1356 = vunpack.c.h.b16 %v763
    %v1357 = vunpack.c.l.b16 %v764
    %v1358 = vunpack.c.h.b16 %v764
    %v1359 = vunpack.c.l.b16 %v765
    %v1360 = vunpack.c.h.b16 %v765
    %v1361 = vunpack.c.l.b16 %v766
    %v1362 = vunpack.c.h.b16 %v766
    %v1363 = vunpack.c.l.b16 %v767
    %v1364 = vunpack.c.h.b16 %v767
    %v1365 = vunpack.c.l.b16 %v768
    %v1366 = vunpack.c.h.b16 %v768
    %v1367 = vunpack.c.l.b16 %v769
    %v1368 = vunpack.c.h.b16 %v769
    %v1369 = vunpack.c.l.b16 %v770
    %v1370 = vunpack.c.h.b16 %v770
    %v1371 = vunpack.c.l.b16 %v771
    %v1372 = vunpack.c.h.b16 %v771
    %v1373 = vunpack.c.l.b16 %v772
    %v1374 = vunpack.c.h.b16 %v772
    %v1375 = vunpack.c.l.b16 %v773
    %v1376 = vunpack.c.h.b16 %v773
    %v1377 = vunpack.c.l.b16 %v774
    %v1378 = vunpack.c.h.b16 %v774
    %v1379 = vunpack.c.l.b16 %v775
    %v1380 = vunpack.c.h.b16 %v775
    %v1381 = vunpack.c.l.b16 %v776
    %v1382 = vunpack.c.h.b16 %v776
    %v1383 = vunpack.c.l.b16 %v777
    %v1384 = vunpack.c.h.b16 %v777
    %v1385 = vunpack.c.l.b16 %v778
    %v1386 = vunpack.c.h.b16 %v778
    %v1387 = vunpack.c.l.b16 %v779
    %v1388 = vunpack.c.h.b16 %v779
    %v1389 = vunpack.c.l.b16 %v780
    %v1390 = vunpack.c.h.b16 %v780
    %v1391 = vunpack.c.l.b16 %v781
    %v1392 = vunpack.c.h.b16 %v781
    %v1393 = vunpack.c.l.b16 %v782
    %v1394 = vunpack.c.h.b16 %v782
    %v1395 = vunpack.c.l.b16 %v783
    %v1396 = vunpack.c.h.b16 %v783
    %v1397 = vunpack.c.l.b16 %v784
    %v1398 = vunpack.c.h.b16 %v784
    %v1399 = vunpack.c.l.b16 %v785
    %v1400 = vunpack.c.h.b16 %v785
    %v1401 = vunpack.c.l.b16 %v786
    %v1402 = vunpack.c.h.b16 %v786
    %v1403 = vunpack.c.l.b16 %v787
    %v1404 = vunpack.c.h.b16 %v787
    %v1405 = vunpack.c.l.b16 %v788
    %v1406 = vunpack.c.h.b16 %v788
    %v1407 = vunpack.c.l.b16 %v789
    %v1408 = vunpack.c.h.b16 %v789
    %v1409 = vunpack.c.l.b16 %v790
    %v1410 = vunpack.c.h.b16 %v790
    %v1411 = vunpack.c.l.b16 %v791
    %v1412 = vunpack.c.h.b16 %v791
    %v1413 = vunpack.c.l.b16 %v792
    %v1414 = vunpack.c.h.b16 %v792
    %v1415 = vunpack.c.l.b16 %v793
    %v1416 = vunpack.c.h.b16 %v793
    %v1417 = vunpack.c.l.b16 %v794
    %v1418 = vunpack.c.h.b16 %v794
    %v1419 = vunpack.c.l.b16 %v795
    %v1420 = vunpack.c.h.b16 %v795
    %v1421 = vunpack.c.l.b16 %v796
    %v1422 = vunpack.c.h.b16 %v796
    %v1423 = vunpack.c.l.b16 %v797
    %v1424 = vunpack.c.h.b16 %v797
    %v1425 = vunpack.c.l.b16 %v798
    %v1426 = vunpack.c.h.b16 %v798
    %v1427 = vunpack.c.l.b16 %v799
    %v1428 = vunpack.c.h.b16 %v799
    %v1429 = vunpack.c.l.b16 %v800
    %v1430 = vunpack.c.h.b16 %v800
    %v1431 = vunpack.c.l.b16 %v801
    %v1432 = vunpack.c.h.b16 %v801
    %v1433 = vunpack.c.l.b16 %v802
    %v1434 = vunpack.c.h.b16 %v802
    %v1435 = vunpack.c.l.b16 %v803
    %v1436 = vunpack.c.h.b16 %v803
    %v1437 = vunpack.c.l.b16 %v804
    %v1438 = vunpack.c.h.b16 %v804
    %v1439 = vunpack.c.l.b16 %v805
    %v1440 = vunpack.c.h.b16 %v805
    %v1441 = vunpack.c.l.b16 %v806
    %v1442 = vunpack.c.h.b16 %v806
    %v1443 = vunpack.c.l.b16 %v807
    %v1444 = vunpack.c.h.b16 %v807
    %v1445 = vunpack.c.l.b16 %v808
    %v1446 = vunpack.c.h.b16 %v808
    %v1447 = vunpack.c.l.b16 %v809
    %v1448 = vunpack.c.h.b16 %v809
    %v1449 = vunpack.c.l.b16 %v810
    %v1450 = vunpack.c.h.b16 %v810
    %v1451 = vunpack.c.l.b16 %v811
    %v1452 = vunpack.c.h.b16 %v811
    %v1453 = vunpack.c.l.b16 %v812
    %v1454 = vunpack.c.h.b16 %v812
    %v1455 = vunpack.c.l.b16 %v813
    %v1456 = vunpack.c.h.b16 %v813
    %v1457 = vunpack.c.l.b16 %v814
    %v1458 = vunpack.c.h.b16 %v814
    %v1459 = vunpack.c.l.b16 %v815
    %v1460 = vunpack.c.h.b16 %v815
    %v1461 = vunpack.c.l.b16 %v816
    %v1462 = vunpack.c.h.b16 %v816
    %v1463 = vunpack.c.l.b16 %v817
    %v1464 = vunpack.c.h.b16 %v817
    %v1465 = vunpack.c.l.b16 %v818
    %v1466 = vunpack.c.h.b16 %v818
    %v1467 = vunpack.c.l.b16 %v819
    %v1468 = vunpack.c.h.b16 %v819
    %v1469 = vunpack.c.l.b16 %v820
    %v1470 = vunpack.c.h.b16 %v820
    %v1471 = vunpack.c.l.b16 %v821
    %v1472 = vunpack.c.h.b16 %v821
    %v1473 = vunpack.c.l.b16 %v822
    %v1474 = vunpack.c.h.b16 %v822
    %v1475 = vunpack.c.l.b16 %v823
    %v1476 = vunpack.c.h.b16 %v823
    %v1477 = vunpack.c.l.b16 %v824
    %v1478 = vunpack.c.h.b16 %v824
    %v1479 = vunpack.c.l.b16 %v825
    %v1480 = vunpack.c.h.b16 %v825
    %v1481 = vunpack.c.l.b16 %v826
    %v1482 = vunpack.c.h.b16 %v826
    %v1483 = vunpack.c.l.b16 %v827
    %v1484 = vunpack.c.h.b16 %v827
    %v1485 = vunpack.c.l.b16 %v828
    %v1486 = vunpack.c.h.b16 %v828
    %v1487 = vunpack.c.l.b16 %v829
    %v1488 = vunpack.c.h.b16 %v829
    %v1489 = vunpack.c.l.b16 %v830
    %v1490 = vunpack.c.h.b16 %v830
    %v1491 = vunpack.c.l.b16 %v831
    %v1492 = vunpack.c.h.b16 %v831
    %v1493 = vunpack.c.l.b16 %v832
    %v1494 = vunpack.c.h.b16 %v832
    %v1495 = vunpack.c.l.b16 %v833
    %v1496 = vunpack.c.h.b16 %v833
    %v1497 = vunpack.c.l.b16 %v834
    %v1498 = vunpack.c.h.b16 %v834
    %v1499 = vunpack.c.l.b16 %v835
    %v1500 = vunpack.c.h.b16 %v835
    %v1501 = vunpack.c.l.b16 %v836
    %v1502 = vunpack.c.h.b16 %v836
    %v1503 = vunpack.c.l.b16 %v837
    %v1504 = vunpack.c.h.b16 %v837
    %v1505 = vunpack.c.l.b16 %v838
    %v1506 = vunpack.c.h.b16 %v838
    %v1507 = vunpack.c.l.b16 %v839
    %v1508 = vunpack.c.h.b16 %v839
    %v1509 = vunpack.c.l.b16 %v840
    %v1510 = vunpack.c.h.b16 %v840
    %v1511 = vunpack.c.l.b16 %v841
    %v1512 = vunpack.c.h.b16 %v841
    %v1513 = vunpack.c.l.b16 %v842
    %v1514 = vunpack.c.h.b16 %v842
    %v1515 = vunpack.c.l.b16 %v843
    %v1516 = vunpack.c.h.b16 %v843
    %v1517 = vunpack.c.l.b16 %v844
    %v1518 = vunpack.c.h.b16 %v844
    %v1519 = vunpack.c.l.b16 %v845
    %v1520 = vunpack.c.h.b16 %v845
    %v1521 = vunpack.c.l.b16 %v846
    %v1522 = vunpack.c.h.b16 %v846
    %v1523 = vunpack.c.l.b16 %v847
    %v1524 = vunpack.c.h.b16 %v847
    %v1525 = vunpack.c.l.b16 %v848
    %v1526 = vunpack.c.h.b16 %v848
    %v1527 = vunpack.c.l.b16 %v849
    %v1528 = vunpack.c.h.b16 %v849
    %v1529 = vunpack.c.l.b16 %v850
    %v1530 = vunpack.c.h.b16 %v850
    %v1531 = vunpack.c.l.b16 %v851
    %v1532 = vunpack.c.h.b16 %v851
    %v1533 = vunpack.c.l.b16 %v852
    %v1534 = vunpack.c.h.b16 %v852
    %v1535 = vunpack.c.l.b16 %v853
    %v1536 = vunpack.c.h.b16 %v853
    %v1537 = vunpack.c.l.b16 %v854
    %v1538 = vunpack.c.h.b16 %v854
    %v1539 = vunpack.c.l.b16 %v855
    %v1540 = vunpack.c.h.b16 %v855
    %v1541 = vunpack.c.l.b16 %v856
    %v1542 = vunpack.c.h.b16 %v856
    %v1543 = vunpack.c.l.b16 %v857
    %v1544 = vunpack.c.h.b16 %v857
    %v1545 = vunpack.c.l.b16 %v858
    %v1546 = vunpack.c.h.b16 %v858
    %v1547 = vunpack.c.l.b16 %v859
    %v1548 = vunpack.c.h.b16 %v859
    %v1549 = vunpack.c.l.b16 %v860
    %v1550 = vunpack.c.h.b16 %v860
    %v1551 = vunpack.c.l.b16 %v861
    %v1552 = vunpack.c.h.b16 %v861
    %v1553 = vunpack.c.l.b16 %v862
    %v1554 = vunpack.c.h.b16 %v862
    %v1555 = vunpack.c.l.b16 %v863
    %v1556 = vunpack.c.h.b16 %v863
    %v1557 = vunpack.c.l.b16 %v864
    %v1558 = vunpack.c.h.b16 %v864
    %v1559 = vunpack.c.l.b16 %v865
    %v1560 = vunpack.c.h.b16 %v865
    %v1561 = vunpack.c.l.b16 %v866
    %v1562 = vunpack.c.h.b16 %v866
    %v1563 = vunpack.c.l.b16 %v867
    %v1564 = vunpack.c.h.b16 %v867
    %v1565 = vunpack.c.l.b16 %v868
    %v1566 = vunpack.c.h.b16 %v868
    %v1567 = vunpack.c.l.b16 %v869
    %v1568 = vunpack.c.h.b16 %v869
    %v1569 = vunpack.c.l.b16 %v870
    %v1570 = vunpack.c.h.b16 %v870
    %v1571 = vunpack.c.l.b16 %v871
    %v1572 = vunpack.c.h.b16 %v871
    %v1573 = vunpack.c.l.b16 %v872
    %v1574 = vunpack.c.h.b16 %v872
    %v1575 = vunpack.c.l.b16 %v873
    %v1576 = vunpack.c.h.b16 %v873
    %v1577 = vunpack.c.l.b16 %v874
    %v1578 = vunpack.c.h.b16 %v874
    %v1579 = vunpack.c.l.b16 %v875
    %v1580 = vunpack.c.h.b16 %v875
    %v1581 = vunpack.c.l.b16 %v876
    %v1582 = vunpack.c.h.b16 %v876
    %v1583 = vunpack.c.l.b16 %v877
    %v1584 = vunpack.c.h.b16 %v877
    %v1585 = vunpack.c.l.b16 %v878
    %v1586 = vunpack.c.h.b16 %v878
    %v1587 = vunpack.c.l.b16 %v879
    %v1588 = vunpack.c.h.b16 %v879
    %v1589 = vunpack.c.l.b16 %v880
    %v1590 = vunpack.c.h.b16 %v880
    %v1591 = vunpack.c.l.b16 %v881
    %v1592 = vunpack.c.h.b16 %v881
    %v1593 = vunpack.c.l.b16 %v882
    %v1594 = vunpack.c.h.b16 %v882
    %v1595 = vunpack.c.l.b16 %v883
    %v1596 = vunpack.c.h.b16 %v883
    %v1597 = vunpack.c.l.b16 %v884
    %v1598 = vunpack.c.h.b16 %v884
    %v1599 = vunpack.c.l.b16 %v885
    %v1600 = vunpack.c.h.b16 %v885
    %v1601 = vunpack.c.l.b16 %v886
    %v1602 = vunpack.c.h.b16 %v886
    %v1603 = vunpack.c.l.b16 %v887
    %v1604 = vunpack.c.h.b16 %v887
    %v1605 = vunpack.c.l.b16 %v888
    %v1606 = vunpack.c.h.b16 %v888
    %v1607 = vunpack.c.l.b16 %v889
    %v1608 = vunpack.c.h.b16 %v889
    %v1609 = vunpack.c.l.b16 %v890
    %v1610 = vunpack.c.h.b16 %v890
    %v1611 = vunpack.c.l.b16 %v891
    %v1612 = vunpack.c.h.b16 %v891
    %v1613 = vunpack.c.l.b16 %v892
    %v1614 = vunpack.c.h.b16 %v892
    %v1615 = vunpack.c.l.b16 %v893
    %v1616 = vunpack.c.h.b16 %v893
    %v1617 = vunpack.c.l.b16 %v894
    %v1618 = vunpack.c.h.b16 %v894
    %v1619 = vunpack.c.l.b16 %v895
    %v1620 = vunpack.c.h.b16 %v895
    %v1621 = vunpack.c.l.b16 %v896
    %v1622 = vunpack.c.h.b16 %v896
    %v1623 = vunpack.c.l.b16 %v897
    %v1624 = vunpack.c.h.b16 %v897
    %v1625 = vunpack.c.l.b16 %v898
    %v1626 = vunpack.c.h.b16 %v898
    %v1627 = vunpack.c.l.b16 %v899
    %v1628 = vunpack.c.h.b16 %v899
    %v1629 = vunpack.c.l.b16 %v900
    %v1630 = vunpack.c.h.b16 %v900
    %v1631 = vunpack.c.l.b16 %v901
    %v1632 = vunpack.c.h.b16 %v901
    %v1633 = vunpack.c.l.b16 %v902
    %v1634 = vunpack.c.h.b16 %v902
    %v1635 = vunpack.c.l.b16 %v903
    %v1636 = vunpack.c.h.b16 %v903
    %v1637 = vunpack.c.l.b16 %v904
    %v1638 = vunpack.c.h.b16 %v904
    %v1639 = vunpack.c.l.b16 %v905
    %v1640 = vunpack.c.h.b16 %v905
    %v1641 = vunpack.c.l.b16 %v906
    %v1642 = vunpack.c.h.b16 %v906
    %v1643 = vunpack.c.l.b16 %v907
    %v1644 = vunpack.c.h.b16 %v907
    %v1645 = vunpack.c.l.b16 %v908
    %v1646 = vunpack.c.h.b16 %v908
    %v1647 = vunpack.c.l.b16 %v909
    %v1648 = vunpack.c.h.b16 %v909
    %v1649 = vunpack.c.l.b16 %v910
    %v1650 = vunpack.c.h.b16 %v910
    %v1651 = vunpack.c.l.b16 %v911
    %v1652 = vunpack.c.h.b16 %v911
    %v1653 = vunpack.c.l.b16 %v912
    %v1654 = vunpack.c.h.b16 %v912
    %v1655 = vunpack.c.l.b16 %v913
    %v1656 = vunpack.c.h.b16 %v913
    %v1657 = vunpack.c.l.b16 %v914
    %v1658 = vunpack.c.h.b16 %v914
    %v1659 = vunpack.c.l.b16 %v915
    %v1660 = vunpack.c.h.b16 %v915
    %v1661 = vunpack.c.l.b16 %v916
    %v1662 = vunpack.c.h.b16 %v916
    %v1663 = vunpack.c.l.b16 %v917
    %v1664 = vunpack.c.h.b16 %v917
    %v1665 = vunpack.c.l.b16 %v918
    %v1666 = vunpack.c.h.b16 %v918
    %v1667 = vunpack.c.l.b16 %v919
    %v1668 = vunpack.c.h.b16 %v919
    %v1669 = vunpack.c.l.b16 %v920
    %v1670 = vunpack.c.h.b16 %v920
    %v1671 = vunpack.c.l.b16 %v921
    %v1672 = vunpack.c.h.b16 %v921
    %v1673 = vunpack.c.l.b16 %v922
    %v1674 = vunpack.c.h.b16 %v922
    %v1675 = vunpack.c.l.b16 %v923
    %v1676 = vunpack.c.h.b16 %v923
    %v1677 = vunpack.c.l.b16 %v924
    %v1678 = vunpack.c.h.b16 %v924
    %v1679 = vunpack.c.l.b16 %v925
    %v1680 = vunpack.c.h.b16 %v925
    %v1681 = vunpack.c.l.b16 %v926
    %v1682 = vunpack.c.h.b16 %v926
    %v1683 = vunpack.c.l.b16 %v927
    %v1684 = vunpack.c.h.b16 %v927
    %v1685 = vunpack.c.l.b16 %v928
    %v1686 = vunpack.c.h.b16 %v928
    %v1687 = vunpack.c.l.b16 %v929
    %v1688 = vunpack.c.h.b16 %v929
    %v1689 = vunpack.c.l.b16 %v930
    %v1690 = vunpack.c.h.b16 %v930
    %v1691 = vunpack.c.l.b16 %v931
    %v1692 = vunpack.c.h.b16 %v931
    %v1693 = vunpack.c.l.b16 %v932
    %v1694 = vunpack.c.h.b16 %v932
    %v1695 = vunpack.c.l.b16 %v933
    %v1696 = vunpack.c.h.b16 %v933
    %v1697 = vunpack.c.l.b16 %v934
    %v1698 = vunpack.c.h.b16 %v934
    %v1699 = vunpack.c.l.b16 %v935
    %v1700 = vunpack.c.h.b16 %v935
    %v1701 = vunpack.c.l.b16 %v936
    %v1702 = vunpack.c.h.b16 %v936
    %v1703 = vunpack.c.l.b16 %v937
    %v1704 = vunpack.c.h.b16 %v937
    %v1705 = vunpack.c.l.b16 %v938
    %v1706 = vunpack.c.h.b16 %v938
    %v1707 = vunpack.c.l.b16 %v939
    %v1708 = vunpack.c.h.b16 %v939
    %v1709 = vunpack.c.l.b16 %v940
    %v1710 = vunpack.c.h.b16 %v940
    %v1711 = vunpack.c.l.b16 %v941
    %v1712 = vunpack.c.h.b16 %v941
    %v1713 = vunpack.c.l.b16 %v942
    %v1714 = vunpack.c.h.b16 %v942
    %v1715 = vunpack.c.l.b16 %v943
    %v1716 = vunpack.c.h.b16 %v943
    %v1717 = vunpack.c.l.b16 %v944
    %v1718 = vunpack.c.h.b16 %v944
    %v1719 = vunpack.c.l.b16 %v945
    %v1720 = vunpack.c.h.b16 %v945
    %v1721 = vunpack.c.l.b16 %v946
    %v1722 = vunpack.c.h.b16 %v946
    %v1723 = vunpack.c.l.b16 %v947
    %v1724 = vunpack.c.h.b16 %v947
    %v1725 = vunpack.c.l.b16 %v948
    %v1726 = vunpack.c.h.b16 %v948
    %v1727 = vunpack.c.l.b16 %v949
    %v1728 = vunpack.c.h.b16 %v949
    %v1729 = vunpack.c.l.b16 %v950
    %v1730 = vunpack.c.h.b16 %v950
    %v1731 = vunpack.c.l.b16 %v951
    %v1732 = vunpack.c.h.b16 %v951
    %v1733 = vunpack.c.l.b16 %v952
    %v1734 = vunpack.c.h.b16 %v952
    %v1735 = vunpack.c.l.b16 %v953
    %v1736 = vunpack.c.h.b16 %v953
    %v1737 = vunpack.c.l.b16 %v954
    %v1738 = vunpack.c.h.b16 %v954
    %v1739 = vunpack.c.l.b16 %v955
    %v1740 = vunpack.c.h.b16 %v955
    %v1741 = vunpack.c.l.b16 %v956
    %v1742 = vunpack.c.h.b16 %v956
    %v1743 = vunpack.c.l.b16 %v957
    %v1744 = vunpack.c.h.b16 %v957
    %v1745 = vunpack.c.l.b16 %v958
    %v1746 = vunpack.c.h.b16 %v958
    %v1747 = vunpack.c.l.b16 %v959
    %v1748 = vunpack.c.h.b16 %v959
    %v1749 = vunpack.c.l.b16 %v960
    %v1750 = vunpack.c.h.b16 %v960
    %v1751 = vunpack.c.l.b16 %v961
    %v1752 = vunpack.c.h.b16 %v961
    %v1753 = vunpack.c.l.b16 %v962
    %v1754 = vunpack.c.h.b16 %v962
    %v1755 = vunpack.c.l.b16 %v963
    %v1756 = vunpack.c.h.b16 %v963
    %v1757 = vunpack.c.l.b16 %v964
    %v1758 = vunpack.c.h.b16 %v964
    %v1759 = vunpack.c.l.b16 %v965
    %v1760 = vunpack.c.h.b16 %v965
    %v1761 = vunpack.c.l.b16 %v966
    %v1762 = vunpack.c.h.b16 %v966
    %v1763 = vunpack.c.l.b16 %v967
    %v1764 = vunpack.c.h.b16 %v967
    %v1765 = vunpack.c.l.b16 %v968
    %v1766 = vunpack.c.h.b16 %v968
    %v1767 = vunpack.c.l.b16 %v969
    %v1768 = vunpack.c.h.b16 %v969
    %v1769 = vunpack.c.l.b16 %v970
    %v1770 = vunpack.c.h.b16 %v970
    %v1771 = vunpack.c.l.b16 %v971
    %v1772 = vunpack.c.h.b16 %v971
    %v1773 = vunpack.c.l.b16 %v972
    %v1774 = vunpack.c.h.b16 %v972
    %v1775 = vunpack.c.l.b16 %v973
    %v1776 = vunpack.c.h.b16 %v973
    %v1777 = vunpack.c.l.b16 %v974
    %v1778 = vunpack.c.h.b16 %v974
    %v1779 = vunpack.c.l.b16 %v975
    %v1780 = vunpack.c.h.b16 %v975
    %v1781 = vunpack.c.l.b16 %v976
    %v1782 = vunpack.c.h.b16 %v976
    %v1783 = vunpack.c.l.b16 %v977
    %v1784 = vunpack.c.h.b16 %v977
    %v1785 = vunpack.c.l.b16 %v978
    %v1786 = vunpack.c.h.b16 %v978
    %v1787 = vunpack.c.l.b16 %v979
    %v1788 = vunpack.c.h.b16 %v979
    %v1789 = vunpack.c.l.b16 %v980
    %v1790 = vunpack.c.h.b16 %v980
    %v1791 = vpack.c.b16 %v1287, %v1279
    %v1792 = vpack.c.b16 %v1288, %v1280
    %v1793 = vpack.c.b16 %v1289, %v1281
    %v1794 = vpack.c.b16 %v1290, %v1282
    %v1795 = vpack.c.b16 %v1291, %v1283
    %v1796 = vpack.c.b16 %v1292, %v1284
    %v1797 = vpack.c.b16 %v1293, %v1285
    %v1798 = vpack.c.b16 %v1294, %v1286
    %v1799 = vpack.c.b16 %v1303, %v1295
    %v1800 = vpack.c.b16 %v1304, %v1296
    %v1801 = vpack.c.b16 %v1305, %v1297
    %v1802 = vpack.c.b16 %v1306, %v1298
    %v1803 = vpack.c.b16 %v1307, %v1299
    %v1804 = vpack.c.b16 %v1308, %v1300
    %v1805 = vpack.c.b16 %v1309, %v1301
    %v1806 = vpack.c.b16 %v1310, %v1302
    %v1807 = vpack.c.b16 %v1319, %v1311
    %v1808 = vpack.c.b16 %v1320, %v1312
    %v1809 = vpack.c.b16 %v1321, %v1313
    %v1810 = vpack.c.b16 %v1322, %v1314
    %v1811 = vpack.c.b16 %v1323, %v1315
    %v1812 = vpack.c.b16 %v1324, %v1316
    %v1813 = vpack.c.b16 %v1325, %v1317
    %v1814 = vpack.c.b16 %v1326, %v1318
    %v1815 = vpack.c.b16 %v1335, %v1327
    %v1816 = vpack.c.b16 %v1336, %v1328
    %v1817 = vpack.c.b16 %v1337, %v1329
    %v1818 = vpack.c.b16 %v1338, %v1330
    %v1819 = vpack.c.b16 %v1339, %v1331
    %v1820 = vpack.c.b16 %v1340, %v1332
    %v1821 = vpack.c.b16 %v1341, %v1333
    %v1822 = vpack.c.b16 %v1342, %v1334
    %v1823 = vpack.c.b16 %v1351, %v1343
    %v1824 = vpack.c.b16 %v1352, %v1344
    %v1825 = vpack.c.b16 %v1353, %v1345
    %v1826 = vpack.c.b16 %v1354, %v1346
    %v1827 = vpack.c.b16 %v1355, %v1347
    %v1828 = vpack.c.b16 %v1356, %v1348
    %v1829 = vpack.c.b16 %v1357, %v1349
    %v1830 = vpack.c.b16 %v1358, %v1350
    %v1831 = vpack.c.b16 %v1367, %v1359
    %v1832 = vpack.c.b16 %v1368, %v1360
    %v1833 = vpack.c.b16 %v1369, %v1361
    %v1834 = vpack.c.b16 %v1370, %v1362
    %v1835 = vpack.c.b16 %v1371, %v1363
    %v1836 = vpack.c.b16 %v1372, %v1364
    %v1837 = vpack.c.b16 %v1373, %v1365
    %v1838 = vpack.c.b16 %v1374, %v1366
    %v1839 = vpack.c.b16 %v1383, %v1375
    %v1840 = vpack.c.b16 %v1384, %v1376
    %v1841 = vpack.c.b16 %v1385, %v1377
    %v1842 = vpack.c.b16 %v1386, %v1378
    %v1843 = vpack.c.b16 %v1387, %v1379
    %v1844 = vpack.c.b16 %v1388, %v1380
    %v1845 = vpack.c.b16 %v1389, %v1381
    %v1846 = vpack.c.b16 %v1390, %v1382
    %v1847 = vpack.c.b16 %v1399, %v1391
    %v1848 = vpack.c.b16 %v1400, %v1392
    %v1849 = vpack.c.b16 %v1401, %v1393
    %v1850 = vpack.c.b16 %v1402, %v1394
    %v1851 = vpack.c.b16 %v1403, %v1395
    %v1852 = vpack.c.b16 %v1404, %v1396
    %v1853 = vpack.c.b16 %v1405, %v1397
    %v1854 = vpack.c.b16 %v1406, %v1398
    %v1855 = vpack.c.b16 %v1415, %v1407
    %v1856 = vpack.c.b16 %v1416, %v1408
    %v1857 = vpack.c.b16 %v1417, %v1409
    %v1858 = vpack.c.b16 %v1418, %v1410
    %v1859 = vpack.c.b16 %v1419, %v1411
    %v1860 = vpack.c.b16 %v1420, %v1412
    %v1861 = vpack.c.b16 %v1421, %v1413
    %v1862 = vpack.c.b16 %v1422, %v1414
    %v1863 = vpack.c.b16 %v1431, %v1423
    %v1864 = vpack.c.b16 %v1432, %v1424
    %v1865 = vpack.c.b16 %v1433, %v1425
    %v1866 = vpack.c.b16 %v1434, %v1426
    %v1867 = vpack.c.b16 %v1435, %v1427
    %v1868 = vpack.c.b16 %v1436, %v1428
    %v1869 = vpack.c.b16 %v1437, %v1429
    %v1870 = vpack.c.b16 %v1438, %v1430
    %v1871 = vpack.c.b16 %v1447, %v1439
    %v1872 = vpack.c.b16 %v1448, %v1440
    %v1873 = vpack.c.b16 %v1449, %v1441
    %v1874 = vpack.c.b16 %v1450, %v1442
    %v1875 = vpack.c.b16 %v1451, %v1443
    %v1876 = vpack.c.b16 %v1452, %v1444
    %v1877 = vpack.c.b16 %v1453, %v1445
    %v1878 = vpack.c.b16 %v1454, %v1446
    %v1879 = vpack.c.b16 %v1463, %v1455
    %v1880 = vpack.c.b16 %v1464, %v1456
    %v1881 = vpack.c.b16 %v1465, %v1457
    %v1882 = vpack.c.b16 %v1466, %v1458
    %v1883 = vpack.c.b16 %v1467, %v1459
    %v1884 = vpack.c.b16 %v1468, %v1460
    %v1885 = vpack.c.b16 %v1469, %v1461
    %v1886 = vpack.c.b16 %v1470, %v1462
    %v1887 = vpack.c.b16 %v1479, %v1471
    %v1888 = vpack.c.b16 %v1480, %v1472
    %v1889 = vpack.c.b16 %v1481, %v1473
    %v1890 = vpack.c.b16 %v1482, %v1474
    %v1891 = vpack.c.b16 %v1483, %v1475
    %v1892 = vpack.c.b16 %v1484, %v1476
    %v1893 = vpack.c.b16 %v1485, %v1477
    %v1894 = vpack.c.b16 %v1486, %v1478
    %v1895 = vpack.c.b16 %v1495, %v1487
    %v1896 = vpack.c.b16 %v1496, %v1488
    %v1897 = vpack.c.b16 %v1497, %v1489
    %v1898 = vpack.c.b16 %v1498, %v1490
    %v1899 = vpack.c.b16 %v1499, %v1491
    %v1900 = vpack.c.b16 %v1500, %v1492
    %v1901 = vpack.c.b16 %v1501, %v1493
    %v1902 = vpack.c.b16 %v1502, %v1494
    %v1903 = vpack.c.b16 %v1511, %v1503
    %v1904 = vpack.c.b16 %v1512, %v1504
    %v1905 = vpack.c.b16 %v1513, %v1505
    %v1906 = vpack.c.b16 %v1514, %v1506
    %v1907 = vpack.c.b16 %v1515, %v1507
    %v1908 = vpack.c.b16 %v1516, %v1508
    %v1909 = vpack.c.b16 %v1517, %v1509
    %v1910 = vpack.c.b16 %v1518, %v1510
    %v1911 = vpack.c.b16 %v1527, %v1519
    %v1912 = vpack.c.b16 %v1528, %v1520
    %v1913 = vpack.c.b16 %v1529, %v1521
    %v1914 = vpack.c.b16 %v1530, %v1522
    %v1915 = vpack.c.b16 %v1531, %v1523
    %v1916 = vpack.c.b16 %v1532, %v1524
    %v1917 = vpack.c.b16 %v1533, %v1525
    %v1918 = vpack.c.b16 %v1534, %v1526
    %v1919 = vpack.c.b16 %v1543, %v1535
    %v1920 = vpack.c.b16 %v1544, %v1536
    %v1921 = vpack.c.b16 %v1545, %v1537
    %v1922 = vpack.c.b16 %v1546, %v1538
    %v1923 = vpack.c.b16 %v1547, %v1539
    %v1924 = vpack.c.b16 %v1548, %v1540
    %v1925 = vpack.c.b16 %v1549, %v1541
    %v1926 = vpack.c.b16 %v1550, %v1542
    %v1927 = vpack.c.b16 %v1559, %v1551
    %v1928 = vpack.c.b16 %v1560, %v1552
    %v1929 = vpack.c.b16 %v1561, %v1553
    %v1930 = vpack.c.b16 %v1562, %v1554
    %v1931 = vpack.c.b16 %v1563, %v1555
    %v1932 = vpack.c.b16 %v1564, %v1556
    %v1933 = vpack.c.b16 %v1565, %v1557
    %v1934 = vpack.c.b16 %v1566, %v1558
    %v1935 = vpack.c.b16 %v1575, %v1567
    %v1936 = vpack.c.b16 %v1576, %v1568
    %v1937 = vpack.c.b16 %v1577, %v1569
    %v1938 = vpack.c.b16 %v1578, %v1570
    %v1939 = vpack.c.b16 %v1579, %v1571
    %v1940 = vpack.c.b16 %v1580, %v1572
    %v1941 = vpack.c.b16 %v1581, %v1573
    %v1942 = vpack.c.b16 %v1582, %v1574
    %v1943 = vpack.c.b16 %v1591, %v1583
    %v1944 = vpack.c.b16 %v1592, %v1584
    %v1945 = vpack.c.b16 %v1593, %v1585
    %v1946 = vpack.c.b16 %v1594, %v1586
    %v1947 = vpack.c.b16 %v1595, %v1587
    %v1948 = vpack.c.b16 %v1596, %v1588
    %v1949 = vpack.c.b16 %v1597, %v1589
    %v1950 = vpack.c.b16 %v1598, %v1590
    %v1951 = vpack.c.b16 %v1607, %v1599
    %v1952 = vpack.c.b16 %v1608, %v1600
    %v1953 = vpack.c.b16 %v1609, %v1601
    %v1954 = vpack.c.b16 %v1610, %v1602
    %v1955 = vpack.c.b16 %v1611, %v1603
    %v1956 = vpack.c.b16 %v1612, %v1604
    %v1957 = vpack.c.b16 %v1613, %v1605
    %v1958 = vpack.c.b16 %v1614, %v1606
    %v1959 = vpack.c.b16 %v1623, %v1615
    %v1960 = vpack.c.b16 %v1624, %v1616
    %v1961 = vpack.c.b16 %v1625, %v1617
    %v1962 = vpack.c.b16 %v1626, %v1618
    %v1963 = vpack.c.b16 %v1627, %v1619
    %v1964 = vpack.c.b16 %v1628, %v1620
    %v1965 = vpack.c.b16 %v1629, %v1621
    %v1966 = vpack.c.b16 %v1630, %v1622
    %v1967 = vpack.c.b16 %v1639, %v1631
    %v1968 = vpack.c.b16 %v1640, %v1632
    %v1969 = vpack.c.b16 %v1641, %v1633
    %v1970 = vpack.c.b16 %v1642, %v1634
    %v1971 = vpack.c.b16 %v1643, %v1635
    %v1972 = vpack.c.b16 %v1644, %v1636
    %v1973 = vpack.c.b16 %v1645, %v1637
    %v1974 = vpack.c.b16 %v1646, %v1638
    %v1975 = vpack.c.b16 %v1655, %v1647
    %v1976 = vpack.c.b16 %v1656, %v1648
    %v1977 = vpack.c.b16 %v1657, %v1649
    %v1978 = vpack.c.b16 %v1658, %v1650
    %v1979 = vpack.c.b16 %v1659, %v1651
    %v1980 = vpack.c.b16 %v1660, %v1652
    %v1981 = vpack.c.b16 %v1661, %v1653
    %v1982 = vpack.c.b16 %v1662, %v1654
    %v1983 = vpack.c.b16 %v1671, %v1663
    %v1984 = vpack.c.b16 %v1672, %v1664
    %v1985 = vpack.c.b16 %v1673, %v1665
    %v1986 = vpack.c.b16 %v1674, %v1666
    %v1987 = vpack.c.b16 %v1675, %v1667
    %v1988 = vpack.c.b16 %v1676, %v1668
    %v1989 = vpack.c.b16 %v1677, %v1669
    %v1990 = vpack.c.b16 %v1678, %v1670
    %v1991 = vpack.c.b16 %v1687, %v1679
    %v1992 = vpack.c.b16 %v1688, %v1680
    %v1993 = vpack.c.b16 %v1689, %v1681
    %v1994 = vpack.c.b16 %v1690, %v1682
    %v1995 = vpack.c.b16 %v1691, %v1683
    %v1996 = vpack.c.b16 %v1692, %v1684
    %v1997 = vpack.c.b16 %v1693, %v1685
    %v1998 = vpack.c.b16 %v1694, %v1686
    %v1999 = vpack.c.b16 %v1703, %v1695
    %v2000 = vpack.c.b16 %v1704, %v1696
    %v2001 = vpack.c.b16 %v1705, %v1697
    %v2002 = vpack.c.b16 %v1706, %v1698
    %v2003 = vpack.c.b16 %v1707, %v1699
    %v2004 = vpack.c.b16 %v1708, %v1700
    %v2005 = vpack.c.b16 %v1709, %v1701
    %v2006 = vpack.c.b16 %v1710, %v1702
    %v2007 = vpack.c.b16 %v1719, %v1711
    %v2008 = vpack.c.b16 %v1720, %v1712
    %v2009 = vpack.c.b16 %v1721, %v1713
    %v2010 = vpack.c.b16 %v1722, %v1714
    %v2011 = vpack.c.b16 %v1723, %v1715
    %v2012 = vpack.c.b16 %v1724, %v1716
    %v2013 = vpack.c.b16 %v1725, %v1717
    %v2014 = vpack.c.b16 %v1726, %v1718
    %v2015 = vpack.c.b16 %v1735, %v1727
    %v2016 = vpack.c.b16 %v1736, %v1728
    %v2017 = vpack.c.b16 %v1737, %v1729
    %v2018 = vpack.c.b16 %v1738, %v1730
    %v2019 = vpack.c.b16 %v1739, %v1731
    %v2020 = vpack.c.b16 %v1740, %v1732
    %v2021 = vpack.c.b16 %v1741, %v1733
    %v2022 = vpack.c.b16 %v1742, %v1734
    %v2023 = vpack.c.b16 %v1751, %v1743
    %v2024 = vpack.c.b16 %v1752, %v1744
    %v2025 = vpack.c.b16 %v1753, %v1745
    %v2026 = vpack.c.b16 %v1754, %v1746
    %v2027 = vpack.c.b16 %v1755, %v1747
    %v2028 = vpack.c.b16 %v1756, %v1748
    %v2029 = vpack.c.b16 %v1757, %v1749
    %v2030 = vpack.c.b16 %v1758, %v1750
    %v2031 = vpack.c.b16 %v1767, %v1759
    %v2032 = vpack.c.b16 %v1768, %v1760
    %v2033 = vpack.c.b16 %v1769, %v1761
    %v2034 = vpack.c.b16 %v1770, %v1762
    %v2035 = vpack.c.b16 %v1771, %v1763
    %v2036 = vpack.c.b16 %v1772, %v1764
    %v2037 = vpack.c.b16 %v1773, %v1765
    %v2038 = vpack.c.b16 %v1774, %v1766
    %v2039 = vpack.c.b16 %v1783, %v1775
    %v2040 = vpack.c.b16 %v1784, %v1776
    %v2041 = vpack.c.b16 %v1785, %v1777
    %v2042 = vpack.c.b16 %v1786, %v1778
    %v2043 = vpack.c.b16 %v1787, %v1779
    %v2044 = vpack.c.b16 %v1788, %v1780
    %v2045 = vpack.c.b16 %v1789, %v1781
    %v2046 = vpack.c.b16 %v1790, %v1782
    %2303 = vmatprep.subr.bf16.mxu0 %v1848
    %2304 = vmatpush1.bf16.msra.mxu0 %v1847
    %2305 = vmatprep.subr.bf16.mxu0 %v1840
    %2306 = vmatpush1.bf16.msra.mxu0 %v1839
    %2307 = vmatprep.subr.bf16.mxu0 %v1832
    %2308 = vmatpush1.bf16.msra.mxu0 %v1831
    %2309 = vmatprep.subr.bf16.mxu0 %v1824
    %2310 = vmatpush1.bf16.msra.mxu0 %v1823
    %2311 = vmatprep.subr.bf16.mxu0 %v1816
    %2312 = vmatpush1.bf16.msra.mxu0 %v1815
    %2313 = vmatprep.subr.bf16.mxu0 %v1808
    %2314 = vmatpush1.bf16.msra.mxu0 %v1807
    %2315 = vmatprep.subr.bf16.mxu0 %v1800
    %2316 = vmatpush1.bf16.msra.mxu0 %v1799
    %2317 = vmatprep.subr.bf16.mxu0 %v1792
    %2318 = vmatpush1.bf16.msra.mxu0 %v1791
    %2319 = vmatprep.subr.bf16.mxu0 %v1912
    %2320 = vmatpush2.bf16.msra.mxu0 %v1911
    %2321 = vmatprep.subr.bf16.mxu0 %v1904
    %2322 = vmatpush2.bf16.msra.mxu0 %v1903
    %2323 = vmatprep.subr.bf16.mxu0 %v1896
    %2324 = vmatpush2.bf16.msra.mxu0 %v1895
    %2325 = vmatprep.subr.bf16.mxu0 %v1888
    %2326 = vmatpush2.bf16.msra.mxu0 %v1887
    %2327 = vmatprep.subr.bf16.mxu0 %v1880
    %2328 = vmatpush2.bf16.msra.mxu0 %v1879
    %2329 = vmatprep.subr.bf16.mxu0 %v1872
    %2330 = vmatpush2.bf16.msra.mxu0 %v1871
    %2331 = vmatprep.subr.bf16.mxu0 %v1864
    %2332 = vmatpush2.bf16.msra.mxu0 %v1863
    %2333 = vmatprep.subr.bf16.mxu0 %v1856
    %2334 = vmatpush2.bf16.msra.mxu0 %v1855
    %2335 = vmatprep.mubr.bf16.mxu0 %v722
    %2336 = vmatmul.mubr.bf16.gmra.mxu0 %v721
    %v2337 = vpop.f32.mrf.mxu0
    %v2338 = vadd.f32 %v986, %v2337
    %v2339 = vpop.f32.mrf.mxu0
    %v2340 = vadd.f32 %v990, %v2339
    %v2341 = vpop.f32.mrf.mxu0
    %v2342 = vpop.f32.mrf.mxu0
    %2343 = vdwg.mxu0
    %2344 = vmatprep.subr.bf16.mxu0 %v1976
    %2345 = vmatpush1.bf16.msra.mxu0 %v1975
    %2346 = vmatprep.subr.bf16.mxu0 %v1968
    %2347 = vmatpush1.bf16.msra.mxu0 %v1967
    %2348 = vmatprep.subr.bf16.mxu0 %v1960
    %2349 = vmatpush1.bf16.msra.mxu0 %v1959
    %2350 = vmatprep.subr.bf16.mxu0 %v1952
    %2351 = vmatpush1.bf16.msra.mxu0 %v1951
    %2352 = vmatprep.subr.bf16.mxu0 %v1944
    %2353 = vmatpush1.bf16.msra.mxu0 %v1943
    %2354 = vmatprep.subr.bf16.mxu0 %v1936
    %2355 = vmatpush1.bf16.msra.mxu0 %v1935
    %2356 = vmatprep.subr.bf16.mxu0 %v1928
    %2357 = vmatpush1.bf16.msra.mxu0 %v1927
    %2358 = vmatprep.subr.bf16.mxu0 %v1920
    %2359 = vmatpush1.bf16.msra.mxu0 %v1919
    %2360 = vmatprep.subr.bf16.mxu0 %v2040
    %2361 = vmatpush2.bf16.msra.mxu0 %v2039
    %2362 = vmatprep.subr.bf16.mxu0 %v2032
    %2363 = vmatpush2.bf16.msra.mxu0 %v2031
    %2364 = vmatprep.subr.bf16.mxu0 %v2024
    %2365 = vmatpush2.bf16.msra.mxu0 %v2023
    %2366 = vmatprep.subr.bf16.mxu0 %v2016
    %2367 = vmatpush2.bf16.msra.mxu0 %v2015
    %2368 = vmatprep.subr.bf16.mxu0 %v2008
    %2369 = vmatpush2.bf16.msra.mxu0 %v2007
    %2370 = vmatprep.subr.bf16.mxu0 %v2000
    %2371 = vmatpush2.bf16.msra.mxu0 %v1999
    %2372 = vmatprep.subr.bf16.mxu0 %v1992
    %2373 = vmatpush2.bf16.msra.mxu0 %v1991
    %2374 = vmatprep.subr.bf16.mxu0 %v1984
    %2375 = vmatpush2.bf16.msra.mxu0 %v1983
    %2376 = vmatprep.mubr.bf16.mxu0 %v724
    %2377 = vmatmul.mubr.bf16.gmra.mxu0 %v723
    %v2378 = vpop.f32.mrf.mxu0
    %v2379 = vadd.f32 %v2338, %v2378
    %v2380 = vpop.f32.mrf.mxu0
    %v2381 = vadd.f32 %v2340, %v2380
    %v2382 = vpop.f32.mrf.mxu0
    %v2383 = vpop.f32.mrf.mxu0
    %2384 = vdwg.mxu0
    %2385 = vmatprep.subr.bf16.mxu0 %v1850
    %2386 = vmatpush1.bf16.msra.mxu0 %v1849
    %2387 = vmatprep.subr.bf16.mxu0 %v1842
    %2388 = vmatpush1.bf16.msra.mxu0 %v1841
    %2389 = vmatprep.subr.bf16.mxu0 %v1834
    %2390 = vmatpush1.bf16.msra.mxu0 %v1833
    %2391 = vmatprep.subr.bf16.mxu0 %v1826
    %2392 = vmatpush1.bf16.msra.mxu0 %v1825
    %2393 = vmatprep.subr.bf16.mxu0 %v1818
    %2394 = vmatpush1.bf16.msra.mxu0 %v1817
    %2395 = vmatprep.subr.bf16.mxu0 %v1810
    %2396 = vmatpush1.bf16.msra.mxu0 %v1809
    %2397 = vmatprep.subr.bf16.mxu0 %v1802
    %2398 = vmatpush1.bf16.msra.mxu0 %v1801
    %2399 = vmatprep.subr.bf16.mxu0 %v1794
    %2400 = vmatpush1.bf16.msra.mxu0 %v1793
    %2401 = vmatprep.subr.bf16.mxu0 %v1914
    %2402 = vmatpush2.bf16.msra.mxu0 %v1913
    %2403 = vmatprep.subr.bf16.mxu0 %v1906
    %2404 = vmatpush2.bf16.msra.mxu0 %v1905
    %2405 = vmatprep.subr.bf16.mxu0 %v1898
    %2406 = vmatpush2.bf16.msra.mxu0 %v1897
    %2407 = vmatprep.subr.bf16.mxu0 %v1890
    %2408 = vmatpush2.bf16.msra.mxu0 %v1889
    %2409 = vmatprep.subr.bf16.mxu0 %v1882
    %2410 = vmatpush2.bf16.msra.mxu0 %v1881
    %2411 = vmatprep.subr.bf16.mxu0 %v1874
    %2412 = vmatpush2.bf16.msra.mxu0 %v1873
    %2413 = vmatprep.subr.bf16.mxu0 %v1866
    %2414 = vmatpush2.bf16.msra.mxu0 %v1865
    %2415 = vmatprep.subr.bf16.mxu0 %v1858
    %2416 = vmatpush2.bf16.msra.mxu0 %v1857
    %2417 = vmatprep.mubr.bf16.mxu0 %v722
    %2418 = vmatmul.mubr.bf16.gmra.mxu0 %v721
    %v2419 = vpop.f32.mrf.mxu0
    %v2420 = vadd.f32 %v994, %v2419
    %v2421 = vpop.f32.mrf.mxu0
    %v2422 = vadd.f32 %v998, %v2421
    %v2423 = vpop.f32.mrf.mxu0
    %v2424 = vpop.f32.mrf.mxu0
    %2425 = vdwg.mxu0
    %2426 = vmatprep.subr.bf16.mxu0 %v1978
    %2427 = vmatpush1.bf16.msra.mxu0 %v1977
    %2428 = vmatprep.subr.bf16.mxu0 %v1970
    %2429 = vmatpush1.bf16.msra.mxu0 %v1969
    %2430 = vmatprep.subr.bf16.mxu0 %v1962
    %2431 = vmatpush1.bf16.msra.mxu0 %v1961
    %2432 = vmatprep.subr.bf16.mxu0 %v1954
    %2433 = vmatpush1.bf16.msra.mxu0 %v1953
    %2434 = vmatprep.subr.bf16.mxu0 %v1946
    %2435 = vmatpush1.bf16.msra.mxu0 %v1945
    %2436 = vmatprep.subr.bf16.mxu0 %v1938
    %2437 = vmatpush1.bf16.msra.mxu0 %v1937
    %2438 = vmatprep.subr.bf16.mxu0 %v1930
    %2439 = vmatpush1.bf16.msra.mxu0 %v1929
    %2440 = vmatprep.subr.bf16.mxu0 %v1922
    %2441 = vmatpush1.bf16.msra.mxu0 %v1921
    %2442 = vmatprep.subr.bf16.mxu0 %v2042
    %2443 = vmatpush2.bf16.msra.mxu0 %v2041
    %2444 = vmatprep.subr.bf16.mxu0 %v2034
    %2445 = vmatpush2.bf16.msra.mxu0 %v2033
    %2446 = vmatprep.subr.bf16.mxu0 %v2026
    %2447 = vmatpush2.bf16.msra.mxu0 %v2025
    %2448 = vmatprep.subr.bf16.mxu0 %v2018
    %2449 = vmatpush2.bf16.msra.mxu0 %v2017
    %2450 = vmatprep.subr.bf16.mxu0 %v2010
    %2451 = vmatpush2.bf16.msra.mxu0 %v2009
    %2452 = vmatprep.subr.bf16.mxu0 %v2002
    %2453 = vmatpush2.bf16.msra.mxu0 %v2001
    %2454 = vmatprep.subr.bf16.mxu0 %v1994
    %2455 = vmatpush2.bf16.msra.mxu0 %v1993
    %2456 = vmatprep.subr.bf16.mxu0 %v1986
    %2457 = vmatpush2.bf16.msra.mxu0 %v1985
    %2458 = vmatprep.mubr.bf16.mxu0 %v724
    %2459 = vmatmul.mubr.bf16.gmra.mxu0 %v723
    %v2460 = vpop.f32.mrf.mxu0
    %v2461 = vadd.f32 %v2420, %v2460
    %v2462 = vpop.f32.mrf.mxu0
    %v2463 = vadd.f32 %v2422, %v2462
    %v2464 = vpop.f32.mrf.mxu0
    %v2465 = vpop.f32.mrf.mxu0
    %2466 = vdwg.mxu0
    %2467 = vmatprep.subr.bf16.mxu0 %v1852
    %2468 = vmatpush1.bf16.msra.mxu0 %v1851
    %2469 = vmatprep.subr.bf16.mxu0 %v1844
    %2470 = vmatpush1.bf16.msra.mxu0 %v1843
    %2471 = vmatprep.subr.bf16.mxu0 %v1836
    %2472 = vmatpush1.bf16.msra.mxu0 %v1835
    %2473 = vmatprep.subr.bf16.mxu0 %v1828
    %2474 = vmatpush1.bf16.msra.mxu0 %v1827
    %2475 = vmatprep.subr.bf16.mxu0 %v1820
    %2476 = vmatpush1.bf16.msra.mxu0 %v1819
    %2477 = vmatprep.subr.bf16.mxu0 %v1812
    %2478 = vmatpush1.bf16.msra.mxu0 %v1811
    %2479 = vmatprep.subr.bf16.mxu0 %v1804
    %2480 = vmatpush1.bf16.msra.mxu0 %v1803
    %2481 = vmatprep.subr.bf16.mxu0 %v1796
    %2482 = vmatpush1.bf16.msra.mxu0 %v1795
    %2483 = vmatprep.subr.bf16.mxu0 %v1916
    %2484 = vmatpush2.bf16.msra.mxu0 %v1915
    %2485 = vmatprep.subr.bf16.mxu0 %v1908
    %2486 = vmatpush2.bf16.msra.mxu0 %v1907
    %2487 = vmatprep.subr.bf16.mxu0 %v1900
    %2488 = vmatpush2.bf16.msra.mxu0 %v1899
    %2489 = vmatprep.subr.bf16.mxu0 %v1892
    %2490 = vmatpush2.bf16.msra.mxu0 %v1891
    %2491 = vmatprep.subr.bf16.mxu0 %v1884
    %2492 = vmatpush2.bf16.msra.mxu0 %v1883
    %2493 = vmatprep.subr.bf16.mxu0 %v1876
    %2494 = vmatpush2.bf16.msra.mxu0 %v1875
    %2495 = vmatprep.subr.bf16.mxu0 %v1868
    %2496 = vmatpush2.bf16.msra.mxu0 %v1867
    %2497 = vmatprep.subr.bf16.mxu0 %v1860
    %2498 = vmatpush2.bf16.msra.mxu0 %v1859
    %2499 = vmatprep.mubr.bf16.mxu0 %v722
    %2500 = vmatmul.mubr.bf16.gmra.mxu0 %v721
    %v2501 = vpop.f32.mrf.mxu0
    %v2502 = vadd.f32 %v1002, %v2501
    %v2503 = vpop.f32.mrf.mxu0
    %v2504 = vadd.f32 %v1006, %v2503
    %v2505 = vpop.f32.mrf.mxu0
    %v2506 = vpop.f32.mrf.mxu0
    %2507 = vdwg.mxu0
    %2508 = vmatprep.subr.bf16.mxu0 %v1980
    %2509 = vmatpush1.bf16.msra.mxu0 %v1979
    %2510 = vmatprep.subr.bf16.mxu0 %v1972
    %2511 = vmatpush1.bf16.msra.mxu0 %v1971
    %2512 = vmatprep.subr.bf16.mxu0 %v1964
    %2513 = vmatpush1.bf16.msra.mxu0 %v1963
    %2514 = vmatprep.subr.bf16.mxu0 %v1956
    %2515 = vmatpush1.bf16.msra.mxu0 %v1955
    %2516 = vmatprep.subr.bf16.mxu0 %v1948
    %2517 = vmatpush1.bf16.msra.mxu0 %v1947
    %2518 = vmatprep.subr.bf16.mxu0 %v1940
    %2519 = vmatpush1.bf16.msra.mxu0 %v1939
    %2520 = vmatprep.subr.bf16.mxu0 %v1932
    %2521 = vmatpush1.bf16.msra.mxu0 %v1931
    %2522 = vmatprep.subr.bf16.mxu0 %v1924
    %2523 = vmatpush1.bf16.msra.mxu0 %v1923
    %2524 = vmatprep.subr.bf16.mxu0 %v2044
    %2525 = vmatpush2.bf16.msra.mxu0 %v2043
    %2526 = vmatprep.subr.bf16.mxu0 %v2036
    %2527 = vmatpush2.bf16.msra.mxu0 %v2035
    %2528 = vmatprep.subr.bf16.mxu0 %v2028
    %2529 = vmatpush2.bf16.msra.mxu0 %v2027
    %2530 = vmatprep.subr.bf16.mxu0 %v2020
    %2531 = vmatpush2.bf16.msra.mxu0 %v2019
    %2532 = vmatprep.subr.bf16.mxu0 %v2012
    %2533 = vmatpush2.bf16.msra.mxu0 %v2011
    %2534 = vmatprep.subr.bf16.mxu0 %v2004
    %2535 = vmatpush2.bf16.msra.mxu0 %v2003
    %2536 = vmatprep.subr.bf16.mxu0 %v1996
    %2537 = vmatpush2.bf16.msra.mxu0 %v1995
    %2538 = vmatprep.subr.bf16.mxu0 %v1988
    %2539 = vmatpush2.bf16.msra.mxu0 %v1987
    %2540 = vmatprep.mubr.bf16.mxu0 %v724
    %2541 = vmatmul.mubr.bf16.gmra.mxu0 %v723
    %v2542 = vpop.f32.mrf.mxu0
    %v2543 = vadd.f32 %v2502, %v2542
    %v2544 = vpop.f32.mrf.mxu0
    %v2545 = vadd.f32 %v2504, %v2544
    %v2546 = vpop.f32.mrf.mxu0
    %v2547 = vpop.f32.mrf.mxu0
    %2548 = vdwg.mxu0
    %2549 = vmatprep.subr.bf16.mxu0 %v1854
    %2550 = vmatpush1.bf16.msra.mxu0 %v1853
    %2551 = vmatprep.subr.bf16.mxu0 %v1846
    %2552 = vmatpush1.bf16.msra.mxu0 %v1845
    %2553 = vmatprep.subr.bf16.mxu0 %v1838
    %2554 = vmatpush1.bf16.msra.mxu0 %v1837
    %2555 = vmatprep.subr.bf16.mxu0 %v1830
    %2556 = vmatpush1.bf16.msra.mxu0 %v1829
    %2557 = vmatprep.subr.bf16.mxu0 %v1822
    %2558 = vmatpush1.bf16.msra.mxu0 %v1821
    %2559 = vmatprep.subr.bf16.mxu0 %v1814
    %2560 = vmatpush1.bf16.msra.mxu0 %v1813
    %2561 = vmatprep.subr.bf16.mxu0 %v1806
    %2562 = vmatpush1.bf16.msra.mxu0 %v1805
    %2563 = vmatprep.subr.bf16.mxu0 %v1798
    %2564 = vmatpush1.bf16.msra.mxu0 %v1797
    %2565 = vmatprep.subr.bf16.mxu0 %v1918
    %2566 = vmatpush2.bf16.msra.mxu0 %v1917
    %2567 = vmatprep.subr.bf16.mxu0 %v1910
    %2568 = vmatpush2.bf16.msra.mxu0 %v1909
    %2569 = vmatprep.subr.bf16.mxu0 %v1902
    %2570 = vmatpush2.bf16.msra.mxu0 %v1901
    %2571 = vmatprep.subr.bf16.mxu0 %v1894
    %2572 = vmatpush2.bf16.msra.mxu0 %v1893
    %2573 = vmatprep.subr.bf16.mxu0 %v1886
    %2574 = vmatpush2.bf16.msra.mxu0 %v1885
    %2575 = vmatprep.subr.bf16.mxu0 %v1878
    %2576 = vmatpush2.bf16.msra.mxu0 %v1877
    %2577 = vmatprep.subr.bf16.mxu0 %v1870
    %2578 = vmatpush2.bf16.msra.mxu0 %v1869
    %2579 = vmatprep.subr.bf16.mxu0 %v1862
    %2580 = vmatpush2.bf16.msra.mxu0 %v1861
    %2581 = vmatprep.mubr.bf16.mxu0 %v722
    %2582 = vmatmul.mubr.bf16.gmra.mxu0 %v721
    %v2583 = vpop.f32.mrf.mxu0
    %v2584 = vadd.f32 %v1010, %v2583
    %v2585 = vpop.f32.mrf.mxu0
    %v2586 = vadd.f32 %v1014, %v2585
    %v2587 = vpop.f32.mrf.mxu0
    %v2588 = vpop.f32.mrf.mxu0
    %2589 = vdwg.mxu0
    %2590 = vmatprep.subr.bf16.mxu0 %v1982
    %2591 = vmatpush1.bf16.msra.mxu0 %v1981
    %2592 = vmatprep.subr.bf16.mxu0 %v1974
    %2593 = vmatpush1.bf16.msra.mxu0 %v1973
    %2594 = vmatprep.subr.bf16.mxu0 %v1966
    %2595 = vmatpush1.bf16.msra.mxu0 %v1965
    %2596 = vmatprep.subr.bf16.mxu0 %v1958
    %2597 = vmatpush1.bf16.msra.mxu0 %v1957
    %2598 = vmatprep.subr.bf16.mxu0 %v1950
    %2599 = vmatpush1.bf16.msra.mxu0 %v1949
    %2600 = vmatprep.subr.bf16.mxu0 %v1942
    %2601 = vmatpush1.bf16.msra.mxu0 %v1941
    %2602 = vmatprep.subr.bf16.mxu0 %v1934
    %2603 = vmatpush1.bf16.msra.mxu0 %v1933
    %2604 = vmatprep.subr.bf16.mxu0 %v1926
    %2605 = vmatpush1.bf16.msra.mxu0 %v1925
    %2606 = vmatprep.subr.bf16.mxu0 %v2046
    %2607 = vmatpush2.bf16.msra.mxu0 %v2045
    %2608 = vmatprep.subr.bf16.mxu0 %v2038
    %2609 = vmatpush2.bf16.msra.mxu0 %v2037
    %2610 = vmatprep.subr.bf16.mxu0 %v2030
    %2611 = vmatpush2.bf16.msra.mxu0 %v2029
    %2612 = vmatprep.subr.bf16.mxu0 %v2022
    %2613 = vmatpush2.bf16.msra.mxu0 %v2021
    %2614 = vmatprep.subr.bf16.mxu0 %v2014
    %2615 = vmatpush2.bf16.msra.mxu0 %v2013
    %2616 = vmatprep.subr.bf16.mxu0 %v2006
    %2617 = vmatpush2.bf16.msra.mxu0 %v2005
    %2618 = vmatprep.subr.bf16.mxu0 %v1998
    %2619 = vmatpush2.bf16.msra.mxu0 %v1997
    %2620 = vmatprep.subr.bf16.mxu0 %v1990
    %2621 = vmatpush2.bf16.msra.mxu0 %v1989
    %2622 = vmatprep.mubr.bf16.mxu0 %v724
    %2623 = vmatmul.mubr.bf16.gmra.mxu0 %v723
    %v2624 = vpop.f32.mrf.mxu0
    %v2625 = vadd.f32 %v2584, %v2624
    %v2626 = vpop.f32.mrf.mxu0
    %v2627 = vadd.f32 %v2586, %v2626
    %v2628 = vpop.f32.mrf.mxu0
    %v2629 = vpop.f32.mrf.mxu0
    %2630 = vdwg.mxu0
    %v2631 = vmul.f32 %v2379, 0.2
    %v2632 = vmul.f32 %v2381, 0.2
    %v2633 = vmul.f32 %v2461, 0.2
    %v2634 = vmul.f32 %v2463, 0.2
    %v2635 = vmul.f32 %v2543, 0.2
    %v2636 = vmul.f32 %v2545, 0.2
    %v2637 = vmul.f32 %v2625, 0.2
    %v2638 = vmul.f32 %v2627, 0.2
    %v2639 = vmax.f32 %v2379, %v2631
    %v2640 = vmax.f32 %v2381, %v2632
    %v2641 = vmax.f32 %v2461, %v2633
    %v2642 = vmax.f32 %v2463, %v2634
    %v2643 = vmax.f32 %v2543, %v2635
    %v2644 = vmax.f32 %v2545, %v2636
    %v2645 = vmax.f32 %v2625, %v2637
    %v2646 = vmax.f32 %v2627, %v2638
    %v2647 = vpack.c.bf16 %v2639, %v2639
    %v2648 = vpack.c.bf16 %v2640, %v2640
    %v2649 = vpack.c.bf16 %v2641, %v2641
    %v2650 = vpack.c.bf16 %v2642, %v2642
    %v2651 = vpack.c.bf16 %v2643, %v2643
    %v2652 = vpack.c.bf16 %v2644, %v2644
    %v2653 = vpack.c.bf16 %v2645, %v2645
    %v2654 = vpack.c.bf16 %v2646, %v2646
    %v2655 = vld [vmem:[#allocation11] sm:$0xf]
    %v2656 = vld [vmem:[#allocation11 + $0x4] sm:$0xf]
    %v2657 = vld [vmem:[#allocation11 + $0x8] sm:$0xf]
    %v2658 = vld [vmem:[#allocation11 + $0xc] sm:$0xf]
    %v2659 = vld [vmem:[#allocation11 + $0x10] sm:$0xf]
    %v2660 = vld [vmem:[#allocation11 + $0x14] sm:$0xf]
    %v2661 = vld [vmem:[#allocation11 + $0x18] sm:$0xf]
    %v2662 = vld [vmem:[#allocation11 + $0x1c] sm:$0xf]
    %v2663 = vld [vmem:[#allocation11 + $0x20] sm:$0xf]
    %v2664 = vld [vmem:[#allocation11 + $0x24] sm:$0xf]
    %v2665 = vld [vmem:[#allocation11 + $0x28] sm:$0xf]
    %v2666 = vld [vmem:[#allocation11 + $0x2c] sm:$0xf]
    %v2667 = vld [vmem:[#allocation11 + $0x30] sm:$0xf]
    %v2668 = vld [vmem:[#allocation11 + $0x34] sm:$0xf]
    %v2669 = vld [vmem:[#allocation11 + $0x38] sm:$0xf]
    %v2670 = vld [vmem:[#allocation11 + $0x3c] sm:$0xf]
    %v2671 = vld [vmem:[#allocation11 + $0x40] sm:$0xf]
    %v2672 = vld [vmem:[#allocation11 + $0x44] sm:$0xf]
    %v2673 = vld [vmem:[#allocation11 + $0x48] sm:$0xf]
    %v2674 = vld [vmem:[#allocation11 + $0x4c] sm:$0xf]
    %v2675 = vld [vmem:[#allocation11 + $0x50] sm:$0xf]
    %v2676 = vld [vmem:[#allocation11 + $0x54] sm:$0xf]
    %v2677 = vld [vmem:[#allocation11 + $0x58] sm:$0xf]
    %v2678 = vld [vmem:[#allocation11 + $0x5c] sm:$0xf]
    %v2679 = vld [vmem:[#allocation11 + $0x60] sm:$0xf]
    %v2680 = vld [vmem:[#allocation11 + $0x64] sm:$0xf]
    %v2681 = vld [vmem:[#allocation11 + $0x68] sm:$0xf]
    %v2682 = vld [vmem:[#allocation11 + $0x6c] sm:$0xf]
    %v2683 = vld [vmem:[#allocation11 + $0x70] sm:$0xf]
    %v2684 = vld [vmem:[#allocation11 + $0x74] sm:$0xf]
    %v2685 = vld [vmem:[#allocation11 + $0x78] sm:$0xf]
    %v2686 = vld [vmem:[#allocation11 + $0x7c] sm:$0xf]
    %v2687 = vld [vmem:[#allocation11 + $0x80] sm:$0xf]
    %v2688 = vld [vmem:[#allocation11 + $0x84] sm:$0xf]
    %v2689 = vld [vmem:[#allocation11 + $0x88] sm:$0xf]
    %v2690 = vld [vmem:[#allocation11 + $0x8c] sm:$0xf]
    %v2691 = vld [vmem:[#allocation11 + $0x90] sm:$0xf]
    %v2692 = vld [vmem:[#allocation11 + $0x94] sm:$0xf]
    %v2693 = vld [vmem:[#allocation11 + $0x98] sm:$0xf]
    %v2694 = vld [vmem:[#allocation11 + $0x9c] sm:$0xf]
    %v2695 = vld [vmem:[#allocation11 + $0xa0] sm:$0xf]
    %v2696 = vld [vmem:[#allocation11 + $0xa4] sm:$0xf]
    %v2697 = vld [vmem:[#allocation11 + $0xa8] sm:$0xf]
    %v2698 = vld [vmem:[#allocation11 + $0xac] sm:$0xf]
    %v2699 = vld [vmem:[#allocation11 + $0xb0] sm:$0xf]
    %v2700 = vld [vmem:[#allocation11 + $0xb4] sm:$0xf]
    %v2701 = vld [vmem:[#allocation11 + $0xb8] sm:$0xf]
    %v2702 = vld [vmem:[#allocation11 + $0xbc] sm:$0xf]
    %v2703 = vld [vmem:[#allocation11 + $0xc0] sm:$0xf]
    %v2704 = vld [vmem:[#allocation11 + $0xc4] sm:$0xf]
    %v2705 = vld [vmem:[#allocation11 + $0xc8] sm:$0xf]
    %v2706 = vld [vmem:[#allocation11 + $0xcc] sm:$0xf]
    %v2707 = vld [vmem:[#allocation11 + $0xd0] sm:$0xf]
    %v2708 = vld [vmem:[#allocation11 + $0xd4] sm:$0xf]
    %v2709 = vld [vmem:[#allocation11 + $0xd8] sm:$0xf]
    %v2710 = vld [vmem:[#allocation11 + $0xdc] sm:$0xf]
    %v2711 = vld [vmem:[#allocation11 + $0xe0] sm:$0xf]
    %v2712 = vld [vmem:[#allocation11 + $0xe4] sm:$0xf]
    %v2713 = vld [vmem:[#allocation11 + $0xe8] sm:$0xf]
    %v2714 = vld [vmem:[#allocation11 + $0xec] sm:$0xf]
    %v2715 = vld [vmem:[#allocation11 + $0xf0] sm:$0xf]
    %v2716 = vld [vmem:[#allocation11 + $0xf4] sm:$0xf]
    %v2717 = vld [vmem:[#allocation11 + $0xf8] sm:$0xf]
    %v2718 = vld [vmem:[#allocation11 + $0xfc] sm:$0xf]
    %v2719 = vld [vmem:[#allocation11 + $0x100] sm:$0xf]
    %v2720 = vld [vmem:[#allocation11 + $0x104] sm:$0xf]
    %v2721 = vld [vmem:[#allocation11 + $0x108] sm:$0xf]
    %v2722 = vld [vmem:[#allocation11 + $0x10c] sm:$0xf]
    %v2723 = vld [vmem:[#allocation11 + $0x110] sm:$0xf]
    %v2724 = vld [vmem:[#allocation11 + $0x114] sm:$0xf]
    %v2725 = vld [vmem:[#allocation11 + $0x118] sm:$0xf]
    %v2726 = vld [vmem:[#allocation11 + $0x11c] sm:$0xf]
    %v2727 = vld [vmem:[#allocation11 + $0x120] sm:$0xf]
    %v2728 = vld [vmem:[#allocation11 + $0x124] sm:$0xf]
    %v2729 = vld [vmem:[#allocation11 + $0x128] sm:$0xf]
    %v2730 = vld [vmem:[#allocation11 + $0x12c] sm:$0xf]
    %v2731 = vld [vmem:[#allocation11 + $0x130] sm:$0xf]
    %v2732 = vld [vmem:[#allocation11 + $0x134] sm:$0xf]
    %v2733 = vld [vmem:[#allocation11 + $0x138] sm:$0xf]
    %v2734 = vld [vmem:[#allocation11 + $0x13c] sm:$0xf]
    %v2735 = vld [vmem:[#allocation11 + $0x140] sm:$0xf]
    %v2736 = vld [vmem:[#allocation11 + $0x144] sm:$0xf]
    %v2737 = vld [vmem:[#allocation11 + $0x148] sm:$0xf]
    %v2738 = vld [vmem:[#allocation11 + $0x14c] sm:$0xf]
    %v2739 = vld [vmem:[#allocation11 + $0x150] sm:$0xf]
    %v2740 = vld [vmem:[#allocation11 + $0x154] sm:$0xf]
    %v2741 = vld [vmem:[#allocation11 + $0x158] sm:$0xf]
    %v2742 = vld [vmem:[#allocation11 + $0x15c] sm:$0xf]
    %v2743 = vld [vmem:[#allocation11 + $0x160] sm:$0xf]
    %v2744 = vld [vmem:[#allocation11 + $0x164] sm:$0xf]
    %v2745 = vld [vmem:[#allocation11 + $0x168] sm:$0xf]
    %v2746 = vld [vmem:[#allocation11 + $0x16c] sm:$0xf]
    %v2747 = vld [vmem:[#allocation11 + $0x170] sm:$0xf]
    %v2748 = vld [vmem:[#allocation11 + $0x174] sm:$0xf]
    %v2749 = vld [vmem:[#allocation11 + $0x178] sm:$0xf]
    %v2750 = vld [vmem:[#allocation11 + $0x17c] sm:$0xf]
    %v2751 = vld [vmem:[#allocation11 + $0x180] sm:$0xf]
    %v2752 = vld [vmem:[#allocation11 + $0x184] sm:$0xf]
    %v2753 = vld [vmem:[#allocation11 + $0x188] sm:$0xf]
    %v2754 = vld [vmem:[#allocation11 + $0x18c] sm:$0xf]
    %v2755 = vld [vmem:[#allocation11 + $0x190] sm:$0xf]
    %v2756 = vld [vmem:[#allocation11 + $0x194] sm:$0xf]
    %v2757 = vld [vmem:[#allocation11 + $0x198] sm:$0xf]
    %v2758 = vld [vmem:[#allocation11 + $0x19c] sm:$0xf]
    %v2759 = vld [vmem:[#allocation11 + $0x1a0] sm:$0xf]
    %v2760 = vld [vmem:[#allocation11 + $0x1a4] sm:$0xf]
    %v2761 = vld [vmem:[#allocation11 + $0x1a8] sm:$0xf]
    %v2762 = vld [vmem:[#allocation11 + $0x1ac] sm:$0xf]
    %v2763 = vld [vmem:[#allocation11 + $0x1b0] sm:$0xf]
    %v2764 = vld [vmem:[#allocation11 + $0x1b4] sm:$0xf]
    %v2765 = vld [vmem:[#allocation11 + $0x1b8] sm:$0xf]
    %v2766 = vld [vmem:[#allocation11 + $0x1bc] sm:$0xf]
    %v2767 = vld [vmem:[#allocation11 + $0x1c0] sm:$0xf]
    %v2768 = vld [vmem:[#allocation11 + $0x1c4] sm:$0xf]
    %v2769 = vld [vmem:[#allocation11 + $0x1c8] sm:$0xf]
    %v2770 = vld [vmem:[#allocation11 + $0x1cc] sm:$0xf]
    %v2771 = vld [vmem:[#allocation11 + $0x1d0] sm:$0xf]
    %v2772 = vld [vmem:[#allocation11 + $0x1d4] sm:$0xf]
    %v2773 = vld [vmem:[#allocation11 + $0x1d8] sm:$0xf]
    %v2774 = vld [vmem:[#allocation11 + $0x1dc] sm:$0xf]
    %v2775 = vld [vmem:[#allocation11 + $0x1e0] sm:$0xf]
    %v2776 = vld [vmem:[#allocation11 + $0x1e4] sm:$0xf]
    %v2777 = vld [vmem:[#allocation11 + $0x1e8] sm:$0xf]
    %v2778 = vld [vmem:[#allocation11 + $0x1ec] sm:$0xf]
    %v2779 = vld [vmem:[#allocation11 + $0x1f0] sm:$0xf]
    %v2780 = vld [vmem:[#allocation11 + $0x1f4] sm:$0xf]
    %v2781 = vld [vmem:[#allocation11 + $0x1f8] sm:$0xf]
    %v2782 = vld [vmem:[#allocation11 + $0x1fc] sm:$0xf]
    %v2783 = vld [vmem:[%s8] sm:$0x1]
    %v2785 = vlaneseq
    %v2786 = vshrl.u32 %v2785, 7
    %v2787 = vsub.s32 0, %v2786
    %v2788 = vrot.slane %v2783, %v2787
    %v2918 = vunpack.c.l.b16 %v2655
    %v2919 = vunpack.c.l.b16 %v2656
    %v2920 = vunpack.c.l.b16 %v2657
    %v2921 = vunpack.c.l.b16 %v2658
    %v2922 = vunpack.c.l.b16 %v2659
    %v2923 = vunpack.c.l.b16 %v2660
    %v2924 = vunpack.c.l.b16 %v2661
    %v2925 = vunpack.c.l.b16 %v2662
    %v2926 = vunpack.c.l.b16 %v2663
    %v2927 = vunpack.c.l.b16 %v2664
    %v2928 = vunpack.c.l.b16 %v2665
    %v2929 = vunpack.c.l.b16 %v2666
    %v2930 = vunpack.c.l.b16 %v2667
    %v2931 = vunpack.c.l.b16 %v2668
    %v2932 = vunpack.c.l.b16 %v2669
    %v2933 = vunpack.c.l.b16 %v2670
    %v2934 = vunpack.c.l.b16 %v2671
    %v2935 = vunpack.c.l.b16 %v2672
    %v2936 = vunpack.c.l.b16 %v2673
    %v2937 = vunpack.c.l.b16 %v2674
    %v2938 = vunpack.c.l.b16 %v2675
    %v2939 = vunpack.c.l.b16 %v2676
    %v2940 = vunpack.c.l.b16 %v2677
    %v2941 = vunpack.c.l.b16 %v2678
    %v2942 = vunpack.c.l.b16 %v2679
    %v2943 = vunpack.c.l.b16 %v2680
    %v2944 = vunpack.c.l.b16 %v2681
    %v2945 = vunpack.c.l.b16 %v2682
    %v2946 = vunpack.c.l.b16 %v2683
    %v2947 = vunpack.c.l.b16 %v2684
    %v2948 = vunpack.c.l.b16 %v2685
    %v2949 = vunpack.c.l.b16 %v2686
    %v2950 = vunpack.c.l.b16 %v2687
    %v2951 = vunpack.c.l.b16 %v2688
    %v2952 = vunpack.c.l.b16 %v2689
    %v2953 = vunpack.c.l.b16 %v2690
    %v2954 = vunpack.c.l.b16 %v2691
    %v2955 = vunpack.c.l.b16 %v2692
    %v2956 = vunpack.c.l.b16 %v2693
    %v2957 = vunpack.c.l.b16 %v2694
    %v2958 = vunpack.c.l.b16 %v2695
    %v2959 = vunpack.c.l.b16 %v2696
    %v2960 = vunpack.c.l.b16 %v2697
    %v2961 = vunpack.c.l.b16 %v2698
    %v2962 = vunpack.c.l.b16 %v2699
    %v2963 = vunpack.c.l.b16 %v2700
    %v2964 = vunpack.c.l.b16 %v2701
    %v2965 = vunpack.c.l.b16 %v2702
    %v2966 = vunpack.c.l.b16 %v2703
    %v2967 = vunpack.c.l.b16 %v2704
    %v2968 = vunpack.c.l.b16 %v2705
    %v2969 = vunpack.c.l.b16 %v2706
    %v2970 = vunpack.c.l.b16 %v2707
    %v2971 = vunpack.c.l.b16 %v2708
    %v2972 = vunpack.c.l.b16 %v2709
    %v2973 = vunpack.c.l.b16 %v2710
    %v2974 = vunpack.c.l.b16 %v2711
    %v2975 = vunpack.c.l.b16 %v2712
    %v2976 = vunpack.c.l.b16 %v2713
    %v2977 = vunpack.c.l.b16 %v2714
    %v2978 = vunpack.c.l.b16 %v2715
    %v2979 = vunpack.c.l.b16 %v2716
    %v2980 = vunpack.c.l.b16 %v2717
    %v2981 = vunpack.c.l.b16 %v2718
    %v2982 = vunpack.c.l.b16 %v2719
    %v2983 = vunpack.c.l.b16 %v2720
    %v2984 = vunpack.c.l.b16 %v2721
    %v2985 = vunpack.c.l.b16 %v2722
    %v2986 = vunpack.c.l.b16 %v2723
    %v2987 = vunpack.c.l.b16 %v2724
    %v2988 = vunpack.c.l.b16 %v2725
    %v2989 = vunpack.c.l.b16 %v2726
    %v2990 = vunpack.c.l.b16 %v2727
    %v2991 = vunpack.c.l.b16 %v2728
    %v2992 = vunpack.c.l.b16 %v2729
    %v2993 = vunpack.c.l.b16 %v2730
    %v2994 = vunpack.c.l.b16 %v2731
    %v2995 = vunpack.c.l.b16 %v2732
    %v2996 = vunpack.c.l.b16 %v2733
    %v2997 = vunpack.c.l.b16 %v2734
    %v2998 = vunpack.c.l.b16 %v2735
    %v2999 = vunpack.c.l.b16 %v2736
    %v3000 = vunpack.c.l.b16 %v2737
    %v3001 = vunpack.c.l.b16 %v2738
    %v3002 = vunpack.c.l.b16 %v2739
    %v3003 = vunpack.c.l.b16 %v2740
    %v3004 = vunpack.c.l.b16 %v2741
    %v3005 = vunpack.c.l.b16 %v2742
    %v3006 = vunpack.c.l.b16 %v2743
    %v3007 = vunpack.c.l.b16 %v2744
    %v3008 = vunpack.c.l.b16 %v2745
    %v3009 = vunpack.c.l.b16 %v2746
    %v3010 = vunpack.c.l.b16 %v2747
    %v3011 = vunpack.c.l.b16 %v2748
    %v3012 = vunpack.c.l.b16 %v2749
    %v3013 = vunpack.c.l.b16 %v2750
    %v3014 = vunpack.c.l.b16 %v2751
    %v3015 = vunpack.c.l.b16 %v2752
    %v3016 = vunpack.c.l.b16 %v2753
    %v3017 = vunpack.c.l.b16 %v2754
    %v3018 = vunpack.c.l.b16 %v2755
    %v3019 = vunpack.c.l.b16 %v2756
    %v3020 = vunpack.c.l.b16 %v2757
    %v3021 = vunpack.c.l.b16 %v2758
    %v3022 = vunpack.c.l.b16 %v2759
    %v3023 = vunpack.c.l.b16 %v2760
    %v3024 = vunpack.c.l.b16 %v2761
    %v3025 = vunpack.c.l.b16 %v2762
    %v3026 = vunpack.c.l.b16 %v2763
    %v3027 = vunpack.c.l.b16 %v2764
    %v3028 = vunpack.c.l.b16 %v2765
    %v3029 = vunpack.c.l.b16 %v2766
    %v3030 = vunpack.c.l.b16 %v2767
    %v3031 = vunpack.c.l.b16 %v2768
    %v3032 = vunpack.c.l.b16 %v2769
    %v3033 = vunpack.c.l.b16 %v2770
    %v3034 = vunpack.c.l.b16 %v2771
    %v3035 = vunpack.c.l.b16 %v2772
    %v3036 = vunpack.c.l.b16 %v2773
    %v3037 = vunpack.c.l.b16 %v2774
    %v3038 = vunpack.c.l.b16 %v2775
    %v3039 = vunpack.c.l.b16 %v2776
    %v3040 = vunpack.c.l.b16 %v2777
    %v3041 = vunpack.c.l.b16 %v2778
    %v3042 = vunpack.c.l.b16 %v2779
    %v3043 = vunpack.c.l.b16 %v2780
    %v3044 = vunpack.c.l.b16 %v2781
    %v3045 = vunpack.c.l.b16 %v2782
    %v3046 = vpack.c.b16 %v2919, %v2918
    %v3047 = vpack.c.b16 %v2921, %v2920
    %v3048 = vpack.c.b16 %v2923, %v2922
    %v3049 = vpack.c.b16 %v2925, %v2924
    %v3050 = vpack.c.b16 %v2927, %v2926
    %v3051 = vpack.c.b16 %v2929, %v2928
    %v3052 = vpack.c.b16 %v2931, %v2930
    %v3053 = vpack.c.b16 %v2933, %v2932
    %v3054 = vpack.c.b16 %v2935, %v2934
    %v3055 = vpack.c.b16 %v2937, %v2936
    %v3056 = vpack.c.b16 %v2939, %v2938
    %v3057 = vpack.c.b16 %v2941, %v2940
    %v3058 = vpack.c.b16 %v2943, %v2942
    %v3059 = vpack.c.b16 %v2945, %v2944
    %v3060 = vpack.c.b16 %v2947, %v2946
    %v3061 = vpack.c.b16 %v2949, %v2948
    %v3062 = vpack.c.b16 %v2951, %v2950
    %v3063 = vpack.c.b16 %v2953, %v2952
    %v3064 = vpack.c.b16 %v2955, %v2954
    %v3065 = vpack.c.b16 %v2957, %v2956
    %v3066 = vpack.c.b16 %v2959, %v2958
    %v3067 = vpack.c.b16 %v2961, %v2960
    %v3068 = vpack.c.b16 %v2963, %v2962
    %v3069 = vpack.c.b16 %v2965, %v2964
    %v3070 = vpack.c.b16 %v2967, %v2966
    %v3071 = vpack.c.b16 %v2969, %v2968
    %v3072 = vpack.c.b16 %v2971, %v2970
    %v3073 = vpack.c.b16 %v2973, %v2972
    %v3074 = vpack.c.b16 %v2975, %v2974
    %v3075 = vpack.c.b16 %v2977, %v2976
    %v3076 = vpack.c.b16 %v2979, %v2978
    %v3077 = vpack.c.b16 %v2981, %v2980
    %v3078 = vpack.c.b16 %v2983, %v2982
    %v3079 = vpack.c.b16 %v2985, %v2984
    %v3080 = vpack.c.b16 %v2987, %v2986
    %v3081 = vpack.c.b16 %v2989, %v2988
    %v3082 = vpack.c.b16 %v2991, %v2990
    %v3083 = vpack.c.b16 %v2993, %v2992
    %v3084 = vpack.c.b16 %v2995, %v2994
    %v3085 = vpack.c.b16 %v2997, %v2996
    %v3086 = vpack.c.b16 %v2999, %v2998
    %v3087 = vpack.c.b16 %v3001, %v3000
    %v3088 = vpack.c.b16 %v3003, %v3002
    %v3089 = vpack.c.b16 %v3005, %v3004
    %v3090 = vpack.c.b16 %v3007, %v3006
    %v3091 = vpack.c.b16 %v3009, %v3008
    %v3092 = vpack.c.b16 %v3011, %v3010
    %v3093 = vpack.c.b16 %v3013, %v3012
    %v3094 = vpack.c.b16 %v3015, %v3014
    %v3095 = vpack.c.b16 %v3017, %v3016
    %v3096 = vpack.c.b16 %v3019, %v3018
    %v3097 = vpack.c.b16 %v3021, %v3020
    %v3098 = vpack.c.b16 %v3023, %v3022
    %v3099 = vpack.c.b16 %v3025, %v3024
    %v3100 = vpack.c.b16 %v3027, %v3026
    %v3101 = vpack.c.b16 %v3029, %v3028
    %v3102 = vpack.c.b16 %v3031, %v3030
    %v3103 = vpack.c.b16 %v3033, %v3032
    %v3104 = vpack.c.b16 %v3035, %v3034
    %v3105 = vpack.c.b16 %v3037, %v3036
    %v3106 = vpack.c.b16 %v3039, %v3038
    %v3107 = vpack.c.b16 %v3041, %v3040
    %v3108 = vpack.c.b16 %v3043, %v3042
    %v3109 = vpack.c.b16 %v3045, %v3044
    %3174 = vmatprep.subr.bf16.mxu0 0
    %3175 = vmatpush1.bf16.msra.mxu0 %v3053
    %3176 = vmatprep.subr.bf16.mxu0 0
    %3177 = vmatpush1.bf16.msra.mxu0 %v3052
    %3178 = vmatprep.subr.bf16.mxu0 0
    %3179 = vmatpush1.bf16.msra.mxu0 %v3051
    %3180 = vmatprep.subr.bf16.mxu0 0
    %3181 = vmatpush1.bf16.msra.mxu0 %v3050
    %3182 = vmatprep.subr.bf16.mxu0 0
    %3183 = vmatpush1.bf16.msra.mxu0 %v3049
    %3184 = vmatprep.subr.bf16.mxu0 0
    %3185 = vmatpush1.bf16.msra.mxu0 %v3048
    %3186 = vmatprep.subr.bf16.mxu0 0
    %3187 = vmatpush1.bf16.msra.mxu0 %v3047
    %3188 = vmatprep.subr.bf16.mxu0 0
    %3189 = vmatpush1.bf16.msra.mxu0 %v3046
    %3190 = vmatprep.subr.bf16.mxu0 0
    %3191 = vmatpush2.bf16.msra.mxu0 %v3061
    %3192 = vmatprep.subr.bf16.mxu0 0
    %3193 = vmatpush2.bf16.msra.mxu0 %v3060
    %3194 = vmatprep.subr.bf16.mxu0 0
    %3195 = vmatpush2.bf16.msra.mxu0 %v3059
    %3196 = vmatprep.subr.bf16.mxu0 0
    %3197 = vmatpush2.bf16.msra.mxu0 %v3058
    %3198 = vmatprep.subr.bf16.mxu0 0
    %3199 = vmatpush2.bf16.msra.mxu0 %v3057
    %3200 = vmatprep.subr.bf16.mxu0 0
    %3201 = vmatpush2.bf16.msra.mxu0 %v3056
    %3202 = vmatprep.subr.bf16.mxu0 0
    %3203 = vmatpush2.bf16.msra.mxu0 %v3055
    %3204 = vmatprep.subr.bf16.mxu0 0
    %3205 = vmatpush2.bf16.msra.mxu0 %v3054
    %3206 = vmatprep.mubr.bf16.mxu0 %v2648
    %3207 = vmatmul.mubr.bf16.gmra.mxu0 %v2647
    %v3208 = vpop.f32.mrf.mxu0
    %v3209 = vadd.f32 %v2788, %v3208
    %v3210 = vpop.f32.mrf.mxu0
    %v3211 = vpop.f32.mrf.mxu0
    %v3212 = vpop.f32.mrf.mxu0
    %3213 = vdwg.mxu0
    %3214 = vmatprep.subr.bf16.mxu0 0
    %3215 = vmatpush1.bf16.msra.mxu0 %v3069
    %3216 = vmatprep.subr.bf16.mxu0 0
    %3217 = vmatpush1.bf16.msra.mxu0 %v3068
    %3218 = vmatprep.subr.bf16.mxu0 0
    %3219 = vmatpush1.bf16.msra.mxu0 %v3067
    %3220 = vmatprep.subr.bf16.mxu0 0
    %3221 = vmatpush1.bf16.msra.mxu0 %v3066
    %3222 = vmatprep.subr.bf16.mxu0 0
    %3223 = vmatpush1.bf16.msra.mxu0 %v3065
    %3224 = vmatprep.subr.bf16.mxu0 0
    %3225 = vmatpush1.bf16.msra.mxu0 %v3064
    %3226 = vmatprep.subr.bf16.mxu0 0
    %3227 = vmatpush1.bf16.msra.mxu0 %v3063
    %3228 = vmatprep.subr.bf16.mxu0 0
    %3229 = vmatpush1.bf16.msra.mxu0 %v3062
    %3230 = vmatprep.subr.bf16.mxu0 0
    %3231 = vmatpush2.bf16.msra.mxu0 %v3077
    %3232 = vmatprep.subr.bf16.mxu0 0
    %3233 = vmatpush2.bf16.msra.mxu0 %v3076
    %3234 = vmatprep.subr.bf16.mxu0 0
    %3235 = vmatpush2.bf16.msra.mxu0 %v3075
    %3236 = vmatprep.subr.bf16.mxu0 0
    %3237 = vmatpush2.bf16.msra.mxu0 %v3074
    %3238 = vmatprep.subr.bf16.mxu0 0
    %3239 = vmatpush2.bf16.msra.mxu0 %v3073
    %3240 = vmatprep.subr.bf16.mxu0 0
    %3241 = vmatpush2.bf16.msra.mxu0 %v3072
    %3242 = vmatprep.subr.bf16.mxu0 0
    %3243 = vmatpush2.bf16.msra.mxu0 %v3071
    %3244 = vmatprep.subr.bf16.mxu0 0
    %3245 = vmatpush2.bf16.msra.mxu0 %v3070
    %3246 = vmatprep.mubr.bf16.mxu0 %v2650
    %3247 = vmatmul.mubr.bf16.gmra.mxu0 %v2649
    %v3248 = vpop.f32.mrf.mxu0
    %v3249 = vadd.f32 %v3209, %v3248
    %v3250 = vpop.f32.mrf.mxu0
    %v3251 = vpop.f32.mrf.mxu0
    %v3252 = vpop.f32.mrf.mxu0
    %3253 = vdwg.mxu0
    %3254 = vmatprep.subr.bf16.mxu0 0
    %3255 = vmatpush1.bf16.msra.mxu0 %v3085
    %3256 = vmatprep.subr.bf16.mxu0 0
    %3257 = vmatpush1.bf16.msra.mxu0 %v3084
    %3258 = vmatprep.subr.bf16.mxu0 0
    %3259 = vmatpush1.bf16.msra.mxu0 %v3083
    %3260 = vmatprep.subr.bf16.mxu0 0
    %3261 = vmatpush1.bf16.msra.mxu0 %v3082
    %3262 = vmatprep.subr.bf16.mxu0 0
    %3263 = vmatpush1.bf16.msra.mxu0 %v3081
    %3264 = vmatprep.subr.bf16.mxu0 0
    %3265 = vmatpush1.bf16.msra.mxu0 %v3080
    %3266 = vmatprep.subr.bf16.mxu0 0
    %3267 = vmatpush1.bf16.msra.mxu0 %v3079
    %3268 = vmatprep.subr.bf16.mxu0 0
    %3269 = vmatpush1.bf16.msra.mxu0 %v3078
    %3270 = vmatprep.subr.bf16.mxu0 0
    %3271 = vmatpush2.bf16.msra.mxu0 %v3093
    %3272 = vmatprep.subr.bf16.mxu0 0
    %3273 = vmatpush2.bf16.msra.mxu0 %v3092
    %3274 = vmatprep.subr.bf16.mxu0 0
    %3275 = vmatpush2.bf16.msra.mxu0 %v3091
    %3276 = vmatprep.subr.bf16.mxu0 0
    %3277 = vmatpush2.bf16.msra.mxu0 %v3090
    %3278 = vmatprep.subr.bf16.mxu0 0
    %3279 = vmatpush2.bf16.msra.mxu0 %v3089
    %3280 = vmatprep.subr.bf16.mxu0 0
    %3281 = vmatpush2.bf16.msra.mxu0 %v3088
    %3282 = vmatprep.subr.bf16.mxu0 0
    %3283 = vmatpush2.bf16.msra.mxu0 %v3087
    %3284 = vmatprep.subr.bf16.mxu0 0
    %3285 = vmatpush2.bf16.msra.mxu0 %v3086
    %3286 = vmatprep.mubr.bf16.mxu0 %v2652
    %3287 = vmatmul.mubr.bf16.gmra.mxu0 %v2651
    %v3288 = vpop.f32.mrf.mxu0
    %v3289 = vadd.f32 %v3249, %v3288
    %v3290 = vpop.f32.mrf.mxu0
    %v3291 = vpop.f32.mrf.mxu0
    %v3292 = vpop.f32.mrf.mxu0
    %3293 = vdwg.mxu0
    %3294 = vmatprep.subr.bf16.mxu0 0
    %3295 = vmatpush1.bf16.msra.mxu0 %v3101
    %3296 = vmatprep.subr.bf16.mxu0 0
    %3297 = vmatpush1.bf16.msra.mxu0 %v3100
    %3298 = vmatprep.subr.bf16.mxu0 0
    %3299 = vmatpush1.bf16.msra.mxu0 %v3099
    %3300 = vmatprep.subr.bf16.mxu0 0
    %3301 = vmatpush1.bf16.msra.mxu0 %v3098
    %3302 = vmatprep.subr.bf16.mxu0 0
    %3303 = vmatpush1.bf16.msra.mxu0 %v3097
    %3304 = vmatprep.subr.bf16.mxu0 0
    %3305 = vmatpush1.bf16.msra.mxu0 %v3096
    %3306 = vmatprep.subr.bf16.mxu0 0
    %3307 = vmatpush1.bf16.msra.mxu0 %v3095
    %3308 = vmatprep.subr.bf16.mxu0 0
    %3309 = vmatpush1.bf16.msra.mxu0 %v3094
    %3310 = vmatprep.subr.bf16.mxu0 0
    %3311 = vmatpush2.bf16.msra.mxu0 %v3109
    %3312 = vmatprep.subr.bf16.mxu0 0
    %3313 = vmatpush2.bf16.msra.mxu0 %v3108
    %3314 = vmatprep.subr.bf16.mxu0 0
    %3315 = vmatpush2.bf16.msra.mxu0 %v3107
    %3316 = vmatprep.subr.bf16.mxu0 0
    %3317 = vmatpush2.bf16.msra.mxu0 %v3106
    %3318 = vmatprep.subr.bf16.mxu0 0
    %3319 = vmatpush2.bf16.msra.mxu0 %v3105
    %3320 = vmatprep.subr.bf16.mxu0 0
    %3321 = vmatpush2.bf16.msra.mxu0 %v3104
    %3322 = vmatprep.subr.bf16.mxu0 0
    %3323 = vmatpush2.bf16.msra.mxu0 %v3103
    %3324 = vmatprep.subr.bf16.mxu0 0
    %3325 = vmatpush2.bf16.msra.mxu0 %v3102
    %3326 = vmatprep.mubr.bf16.mxu0 %v2654
    %3327 = vmatmul.mubr.bf16.gmra.mxu0 %v2653
    %v3328 = vpop.f32.mrf.mxu0
    %v3329 = vadd.f32 %v3289, %v3328
    %v3330 = vpop.f32.mrf.mxu0
    %v3331 = vpop.f32.mrf.mxu0
    %v3332 = vpop.f32.mrf.mxu0
    %3333 = vdwg.mxu0
    %v3334 = vtanh.pop %v3329
    %v3335 = vpack.c.bf16 %v3334, %v3334
    %3336 = vst [vmem:[#allocation13] sm:$0xf] %v3335
    // Predicated region
    $region62: #{tpu_custom_call.1} parent=1 // pred_check
      _
    $region63: #{tpu_custom_call.1} parent=1 // pred_check_branch
      %3338 = sbr.rel (0) target = $region65
    $region64: #{tpu_custom_call.1} parent=1 // pred_region
      %s3340 = ssub.s32 64, 64
      %3341 = vsyncadd [#allocation4], %s3340
      %s3343 = sshll.u32 [#allocation13], 4
      %s3344 = int_to_ptr.vmem [resolvable:$true] %s3343
      %3346 = dma.vmem_to_hbm [thread:$0]  %s3344, 64, %s9, [#allocation4]
    $region65: #{tpu_custom_call.1} parent=1 // pred_fallthru
      _
    // Predicated region
    $region66: #{tpu_custom_call.1} parent=1 // pred_check
      _
    $region67: #{tpu_custom_call.1} parent=1 // pred_check_branch
      %3348 = sbr.rel (0) target = $region69
    $region68: #{tpu_custom_call.1} parent=1 // pred_region
      %3349 = dma.done [#allocation4], 64
    $region69: #{tpu_custom_call.1} parent=1 // pred_fallthru
      _
    %3350 = vsyncpa [#allocation3], 1
    %3351 = vsyncpa [#allocation6], 1
    %3352 = vsyncpa [#allocation9], 1
    %3353 = vsyncpa [#allocation12], 1
    %3354 = vsyncpa [#allocation4], 1

</llo_original>
